<compile_context>
chip_gen: v5e
topology: v5e:2x2
jax: 0.10.0
libtpu: 0.0.40
codegen_flags: <defaults>
</compile_context>

<pallas_src>
import functools
import math

import jax
import jax.numpy as jnp
from jax.experimental import pallas as pl
from jax.experimental.pallas import tpu as pltpu

_EPS = 1e-5              # nn.BatchNorm1d default eps
F_PAD = 128              # lane-dense padded feature width for all feature dims
_SEG = 2 * F_PAD + 32    # rows per packed MLP segment: W1|b1|gamma|beta|W2|b2


# ---------------------------------------------------------------------------
# In-kernel helpers (traced, not separate kernels)
# ---------------------------------------------------------------------------
def _dot(a, b):
    """MXU matmul: bf16 operands, fp32 accumulation."""
    return jnp.dot(a.astype(jnp.bfloat16), b.astype(jnp.bfloat16),
                   preferred_element_type=jnp.float32)


def _bn_relu(h, gamma, beta):
    """Train-mode BatchNorm1d (single-pass biased batch stats, fp32) + ReLU."""
    mean = jnp.mean(h, axis=0, keepdims=True)
    mean_sq = jnp.mean(h * h, axis=0, keepdims=True)
    var = mean_sq - mean * mean          # single-pass: both reductions independent
    xhat = (h - mean) * jax.lax.rsqrt(var + _EPS)
    return jnp.maximum(gamma * xhat + beta, 0.0)


def _mlp(h_in, read, base, views, rows_per_view):
    """Linear -> per-view BatchNorm1d -> ReLU -> Linear from a packed segment.

    `read(row0, nrows)` returns a (nrows, 128) fp32 parameter tile (for the
    momentum branches it performs the in-vreg EMA blend).  All offsets are
    static and 8-sublane aligned; weights are stored pre-transposed.
    """
    w1 = read(base, F_PAD)                       # (128, 128)
    b1 = read(base + F_PAD, 1)                   # (1, 128)
    gamma = read(base + F_PAD + 8, 1)            # (1, 128)
    beta = read(base + F_PAD + 16, 1)            # (1, 128)
    w2 = read(base + F_PAD + 24, F_PAD)          # (128, 128)
    b2 = read(base + 2 * F_PAD + 24, 1)          # (1, 128)

    h = _dot(h_in, w1) + b1
    if views == 1:
        r = _bn_relu(h, gamma, beta)
    else:
        # per-view batch statistics (each PyTorch _forward call normalizes its
        # own view's batch)
        r = jnp.concatenate(
            [_bn_relu(h[v * rows_per_view:(v + 1) * rows_per_view], gamma, beta)
             for v in range(views)], axis=0)
    return _dot(r, w2) + b2


def _encode(x, read, k_rows, views, rows_per_view):
    """backbone linear (flattened global conv) -> projection-head MLP."""
    f = _dot(x, read(0, k_rows)) + read(k_rows, 1)
    return _mlp(f, read, k_rows + 8, views, rows_per_view)


# ---------------------------------------------------------------------------
# The fused BYOL forward kernel: step 0 = online path, step 1 = momentum path
# ---------------------------------------------------------------------------
def _byol_fwd_kernel(xcat_ref, menc_ref, enc_ref, pred_ref,
                     ema_ref, pz_ref, *, k_rows, half_rows, m, batch):
    step = pl.program_id(0)
    m2 = m * m

    def read_enc(r0, n):
        return enc_ref[pl.ds(r0, n), :]

    def read_pred(r0, n):
        return pred_ref[pl.ds(r0, n), :]

    def read_mom(alpha):
        # in-vreg EMA blend of the momentum weights (fp32), done right before
        # each dot instead of materializing a staged momentum buffer
        def read(r0, n):
            return (menc_ref[pl.ds(r0, n), :] * alpha
                    + enc_ref[pl.ds(r0, n), :] * (1.0 - alpha))
        return read

    @pl.when(step == 0)
    def _online_half():
        # stored momentum buffer, row-half 0:  new = m^2*old + (1-m^2)*online
        ema_ref[...] = (menc_ref[pl.ds(0, half_rows), :] * m2
                        + enc_ref[pl.ds(0, half_rows), :] * (1.0 - m2))
        # merged online chain on [x0; x1] through the shared online weights
        z = _encode(xcat_ref[...], read_enc, k_rows, 2, batch)
        p = _mlp(z, read_pred, 0, 2, batch)
        pz_ref[0] = jnp.concatenate([p[:batch], p[batch:]], axis=1)   # p0 | p1

    @pl.when(step == 1)
    def _momentum_half():
        # stored momentum buffer, row-half 1
        ema_ref[...] = (menc_ref[pl.ds(half_rows, half_rows), :] * m2
                        + enc_ref[pl.ds(half_rows, half_rows), :] * (1.0 - m2))
        x0 = xcat_ref[pl.ds(0, batch), :]
        x1 = xcat_ref[pl.ds(batch, batch), :]
        # momentum branch of _forward(x0,x1): params after EMA #1 (alpha = m)
        z1 = _encode(x1, read_mom(m), k_rows, 1, batch)
        # momentum branch of _forward(x1,x0): params after EMA #2 (alpha = m^2)
        z0 = _encode(x0, read_mom(m2), k_rows, 1, batch)
        pz_ref[0] = jnp.concatenate([z1, z0], axis=1)                 # z1 | z0


# ---------------------------------------------------------------------------
# Functional, jitted wrapper around the single pallas_call
# ---------------------------------------------------------------------------
@functools.partial(jax.jit, static_argnames=("k_pad", "m", "out_dim"))
def _byol_forward(x0, x1, menc_buf, enc_buf, pred_buf, *, k_pad, m, out_dim):
    B = x0.shape[0]
    K = math.prod(x0.shape[1:])
    # glue: NCHW -> (B, K), zero-pad K up to the lane-aligned packed width,
    # and concatenate the two views for the merged online pass
    x0f = jnp.pad(x0.reshape(B, K).astype(jnp.float32), ((0, 0), (0, k_pad - K)))
    x1f = jnp.pad(x1.reshape(B, K).astype(jnp.float32), ((0, 0), (0, k_pad - K)))
    xcat = jnp.concatenate([x0f, x1f], axis=0)                 # (2B, k_pad)

    rows = menc_buf.shape[0]
    half = rows // 2                                           # multiple of 8

    kernel = functools.partial(_byol_fwd_kernel, k_rows=k_pad, half_rows=half,
                               m=float(m), batch=B)

    def const(shape):
        return pl.BlockSpec(shape, lambda i: (0,) * len(shape))

    new_menc, pz = pl.pallas_call(
        kernel,
        grid=(2,),
        in_specs=[
            const((2 * B, k_pad)),       # [x0; x1]
            const(menc_buf.shape),       # packed momentum encoder params
            const(enc_buf.shape),        # packed online encoder params
            const(pred_buf.shape),       # packed prediction-head params
        ],
        out_specs=(
            # each step writes its own disjoint row-half of the new momentum buf
            pl.BlockSpec((half, F_PAD), lambda i: (i, 0)),
            # merged lane-dense output: step 0 -> [p0|p1], step 1 -> [z1|z0]
            pl.BlockSpec((1, B, 2 * F_PAD), lambda i: (i, 0, 0)),
        ),
        out_shape=(
            jax.ShapeDtypeStruct((rows, F_PAD), jnp.float32),
            jax.ShapeDtypeStruct((2, B, 2 * F_PAD), jnp.float32),
        ),
        compiler_params=pltpu.CompilerParams(
            dimension_semantics=("parallel",)),
    )(xcat, menc_buf, enc_buf, pred_buf)

    # slice padded lanes back to the true out_dim (layout plumbing, fused by XLA)
    p0 = pz[0, :, :out_dim]
    p1 = pz[0, :, F_PAD:F_PAD + out_dim]
    z1 = pz[1, :, :out_dim]
    z0 = pz[1, :, F_PAD:F_PAD + out_dim]
    return new_menc, p0, z1, p1, z0


# ---------------------------------------------------------------------------
# Parameter init (deterministic, PyTorch-ish uniform fan-in init) and packing
# ---------------------------------------------------------------------------
def _init_mlp_params(key, d_in, hidden, d_out):
    k1, k2, k3, k4 = jax.random.split(key, 4)
    s1 = 1.0 / math.sqrt(d_in)
    s2 = 1.0 / math.sqrt(hidden)
    return dict(
        w1=jax.random.uniform(k1, (hidden, d_in), jnp.float32, -s1, s1),
        b1=jax.random.uniform(k2, (hidden,), jnp.float32, -s1, s1),
        gamma=jnp.ones((hidden,), jnp.float32),   # BN weight init
        beta=jnp.zeros((hidden,), jnp.float32),   # BN bias init
        w2=jax.random.uniform(k3, (d_out, hidden), jnp.float32, -s2, s2),
        b2=jax.random.uniform(k4, (d_out,), jnp.float32, -s2, s2),
    )


def _pack_mlp_segment(p, d_in, hidden, d_out):
    """Pack an MLP's params into a lane-dense (_SEG, 128) fp32 buffer.

    Weights are stored transposed and zero-padded; every param starts at an
    8-aligned row so in-kernel slices are tile-aligned views.
    """
    seg = jnp.zeros((_SEG, F_PAD), jnp.float32)
    seg = seg.at[:d_in, :hidden].set(p["w1"].T)
    seg = seg.at[F_PAD, :hidden].set(p["b1"])
    seg = seg.at[F_PAD + 8, :hidden].set(p["gamma"])
    seg = seg.at[F_PAD + 16, :hidden].set(p["beta"])
    seg = seg.at[F_PAD + 24:F_PAD + 24 + hidden, :d_out].set(p["w2"].T)
    seg = seg.at[2 * F_PAD + 24, :d_out].set(p["b2"])
    return seg


def _pack_encoder(backbone, proj, K, k_pad, num_ftrs, hidden, d_out):
    """Pack backbone linear + projection head; rows padded to a multiple of 16
    so the EMA output splits into two 8-aligned row-halves."""
    rows = k_pad + 8 + _SEG
    rows_pad = ((rows + 15) // 16) * 16
    buf = jnp.zeros((rows_pad, F_PAD), jnp.float32)
    buf = buf.at[:K, :num_ftrs].set(backbone["w"].T)
    buf = buf.at[k_pad, :num_ftrs].set(backbone["b"])
    buf = buf.at[k_pad + 8:k_pad + 8 + _SEG, :].set(
        _pack_mlp_segment(proj, num_ftrs, hidden, d_out))
    return buf


class BYOLPallas:
    """JAX/Pallas port of the PyTorch BYOL module's forward pass (fused kernel)."""

    def __init__(self, key, in_shape, num_ftrs=32, hidden_dim=64, out_dim=16, m=0.999):
        C, Hs, Ws = in_shape
        K = C * Hs * Ws
        self.k_pad = ((K + F_PAD - 1) // F_PAD) * F_PAD
        self.out_dim = out_dim
        self.m = float(m)

        kb, kp, kq = jax.random.split(key, 3)
        kb1, kb2 = jax.random.split(kb)
        s = 1.0 / math.sqrt(K)
        # TODO(synk): the backbone is an arbitrary user nn.Module in PyTorch; a
        # synthetic global-conv (== linear on flattened NCHW, then squeeze) is used here.
        backbone = dict(
            w=jax.random.uniform(kb1, (num_ftrs, K), jnp.float32, -s, s),
            b=jax.random.uniform(kb2, (num_ftrs,), jnp.float32, -s, s),
        )
        proj = _init_mlp_params(kp, num_ftrs, hidden_dim, out_dim)
        pred = _init_mlp_params(kq, out_dim, hidden_dim, out_dim)

        # Lane-dense packed parameter buffers (pre-transposed, 128-padded, fp32).
        self.enc_buf = _pack_encoder(backbone, proj, K, self.k_pad,
                                     num_ftrs, hidden_dim, out_dim)
        self.pred_buf = _pack_mlp_segment(pred, out_dim, hidden_dim, out_dim)
        # _init_momentum_encoder: deepcopy equivalent (JAX arrays are immutable).
        self.mom_enc_buf = self.enc_buf
        # TODO(synk): BatchNorm1d running_mean/running_var buffers are not
        # tracked (train-mode forward only), so eval-mode BN would diverge.

    def forward(self, x0, x1):
        new_menc, p0, z1, p1, z0 = _byol_forward(
            x0, x1, self.mom_enc_buf, self.enc_buf, self.pred_buf,
            k_pad=self.k_pad, m=self.m, out_dim=self.out_dim)
        # momentum encoder updated twice per forward(), exactly like the reference
        self.mom_enc_buf = new_menc
        return (z0, p0), (z1, p1)


# ---------------------------------------------------------------------------
# Pure-JAX fp32 reference of the same math (for a tolerance check in __main__)
# ---------------------------------------------------------------------------
def _ref_mlp(h, buf, base):
    w1 = buf[base:base + F_PAD]
    b1 = buf[base + F_PAD]
    gamma = buf[base + F_PAD + 8]
    beta = buf[base + F_PAD + 16]
    w2 = buf[base + F_PAD + 24:base + 2 * F_PAD + 24]
    b2 = buf[base + 2 * F_PAD + 24]
    h = h @ w1 + b1
    mean = h.mean(axis=0)
    var = ((h - mean) ** 2).mean(axis=0)      # two-pass form (faithful to spec)
    r = jnp.maximum(gamma * (h - mean) / jnp.sqrt(var + _EPS) + beta, 0.0)
    return r @ w2 + b2


def _ref_encode(x, buf, k_pad):
    f = x @ buf[:k_pad] + buf[k_pad]
    return _ref_mlp(f, buf, k_pad + 8)


def _reference_forward(x0, x1, menc_buf, enc_buf, pred_buf, k_pad, m, out_dim):
    B = x0.shape[0]
    K = math.prod(x0.shape[1:])
    x0f = jnp.pad(x0.reshape(B, K).astype(jnp.float32), ((0, 0), (0, k_pad - K)))
    x1f = jnp.pad(x1.reshape(B, K).astype(jnp.float32), ((0, 0), (0, k_pad - K)))
    menc1 = menc_buf * m + enc_buf * (1.0 - m)
    menc2 = menc1 * m + enc_buf * (1.0 - m)
    p0 = _ref_mlp(_ref_encode(x0f, enc_buf, k_pad), pred_buf, 0)
    z1 = _ref_encode(x1f, menc1, k_pad)
    p1 = _ref_mlp(_ref_encode(x1f, enc_buf, k_pad), pred_buf, 0)
    z0 = _ref_encode(x0f, menc2, k_pad)
    return (menc2, p0[:, :out_dim], z1[:, :out_dim],
            p1[:, :out_dim], z0[:, :out_dim])


if __name__ == "__main__":
    B, C, Hs, Ws = 8, 4, 8, 8
    num_ftrs, hidden_dim, out_dim = 32, 64, 16

    key = jax.random.PRNGKey(0)
    kx0, kx1, kparams = jax.random.split(key, 3)
    x0 = jax.random.normal(kx0, (B, C, Hs, Ws), jnp.float32)
    x1 = jax.random.normal(kx1, (B, C, Hs, Ws), jnp.float32)

    model = BYOLPallas(kparams, (C, Hs, Ws), num_ftrs=num_ftrs,
                       hidden_dim=hidden_dim, out_dim=out_dim, m=0.999)

    menc_before = model.mom_enc_buf
    (z0, p0), (z1, p1) = model.forward(x0, x1)
    jax.block_until_ready((z0, p0, z1, p1, model.mom_enc_buf))

    assert z0.shape == (B, out_dim) and p0.shape == (B, out_dim)
    assert z1.shape == (B, out_dim) and p1.shape == (B, out_dim)
    assert bool(jnp.all(jnp.isfinite(z0)) & jnp.all(jnp.isfinite(p0))
                & jnp.all(jnp.isfinite(z1)) & jnp.all(jnp.isfinite(p1)))

    # tolerance check against the pure-JAX fp32 reference (kernel uses bf16
    # matmul operands + single-pass BN stats, so allow a small tolerance)
    ref_menc, rp0, rz1, rp1, rz0 = _reference_forward(
        x0, x1, menc_before, model.enc_buf, model.pred_buf,
        model.k_pad, model.m, out_dim)
    for got, want in ((p0, rp0), (z1, rz1), (p1, rp1), (z0, rz0)):
        assert float(jnp.max(jnp.abs(got - want))) < 5e-2
    assert float(jnp.max(jnp.abs(model.mom_enc_buf - ref_menc))) < 1e-4

    print("KERNEL_OK")
</pallas_src>

<mosaic_0001>
module attributes {stable_mosaic.version = 11 : i64} {
  func.func @_byol_fwd_kernel(%arg0: i32, %arg1: memref<16x256xf32, #tpu.memory_space<vmem>>, %arg2: memref<560x128xf32, #tpu.memory_space<vmem>>, %arg3: memref<560x128xf32, #tpu.memory_space<vmem>>, %arg4: memref<288x128xf32, #tpu.memory_space<vmem>>, %arg5: memref<280x128xf32, #tpu.memory_space<vmem>>, %arg6: memref<1x8x256xf32, #tpu.memory_space<vmem>>) attributes {dimension_semantics = [#tpu.dimension_semantics<parallel>], iteration_bounds = array<i64: 2>, scalar_prefetch = 0 : i64, scratch_operands = 0 : i64, tpu.core_type = #tpu.core_type<tc>, window_params = [{pipeline_mode = #tpu.pipeline_mode<synchronous>, transform_indices = @transform_0, window_bounds = array<i64: 16, 256>}, {pipeline_mode = #tpu.pipeline_mode<synchronous>, transform_indices = @transform_1, window_bounds = array<i64: 560, 128>}, {pipeline_mode = #tpu.pipeline_mode<synchronous>, transform_indices = @transform_2, window_bounds = array<i64: 560, 128>}, {pipeline_mode = #tpu.pipeline_mode<synchronous>, transform_indices = @transform_3, window_bounds = array<i64: 288, 128>}, {transform_indices = @transform_4, window_bounds = array<i64: 280, 128>}, {transform_indices = @transform_5, window_bounds = array<i64: 1, 8, 256>}]} {
    %c0_i32 = arith.constant 0 : i32
    %0 = arith.cmpi eq, %arg0, %c0_i32 : i32
    %1 = arith.extui %0 : i1 to i32
    %c0_i32_0 = arith.constant 0 : i32
    %2 = arith.cmpi ne, %1, %c0_i32_0 : i32
    scf.if %2 {
      %c0 = arith.constant 0 : index
      %c0_2 = arith.constant 0 : index
      %6 = vector.load %arg2[%c0, %c0_2] : memref<560x128xf32, #tpu.memory_space<vmem>>, vector<280x128xf32>
      %cst = arith.constant 0.998000979 : f32
      %7 = vector.broadcast %cst : f32 to vector<280x128xf32>
      %8 = arith.mulf %6, %7 : vector<280x128xf32>
      %c0_3 = arith.constant 0 : index
      %c0_4 = arith.constant 0 : index
      %9 = vector.load %arg3[%c0_3, %c0_4] : memref<560x128xf32, #tpu.memory_space<vmem>>, vector<280x128xf32>
      %cst_5 = arith.constant 1.999000e-03 : f32
      %10 = vector.broadcast %cst_5 : f32 to vector<280x128xf32>
      %11 = arith.mulf %9, %10 : vector<280x128xf32>
      %12 = arith.addf %8, %11 : vector<280x128xf32>
      %c0_6 = arith.constant 0 : index
      %c0_7 = arith.constant 0 : index
      %13 = vector.load %arg5[%c0_6, %c0_7] : memref<280x128xf32, #tpu.memory_space<vmem>>, vector<280x128xf32>
      tpu.vector_store %arg5[%c0_6, %c0_7], %12 {strides = array<i32>} : memref<280x128xf32, #tpu.memory_space<vmem>>, vector<280x128xf32>,
      %c0_8 = arith.constant 0 : index
      %c0_9 = arith.constant 0 : index
      %14 = vector.load %arg1[%c0_8, %c0_9] : memref<16x256xf32, #tpu.memory_space<vmem>>, vector<16x256xf32>
      %c0_10 = arith.constant 0 : index
      %c0_11 = arith.constant 0 : index
      %15 = vector.load %arg3[%c0_10, %c0_11] : memref<560x128xf32, #tpu.memory_space<vmem>>, vector<256x128xf32>
      %16 = arith.truncf %14 : vector<16x256xf32> to vector<16x256xbf16>
      %17 = arith.truncf %15 : vector<256x128xf32> to vector<256x128xbf16>
      %cst_12 = arith.constant dense<0.000000e+00> : vector<16x128xf32>
      %18 = tpu.matmul %16, %17, %cst_12 {dimension_numbers = #tpu.dot_dimension_numbers<[1], [0], [0], [1], [0, 0, 1, 1], [], []>} : vector<16x256xbf16>, vector<256x128xbf16>, vector<16x128xf32> -> vector<16x128xf32>
      %c256 = arith.constant 256 : index
      %c0_13 = arith.constant 0 : index
      %19 = vector.load %arg3[%c256, %c0_13] : memref<560x128xf32, #tpu.memory_space<vmem>>, vector<1x128xf32>
      %20 = vector.broadcast %19 : vector<1x128xf32> to vector<16x128xf32>
      %21 = arith.addf %18, %20 : vector<16x128xf32>
      %c264 = arith.constant 264 : index
      %c0_14 = arith.constant 0 : index
      %22 = vector.load %arg3[%c264, %c0_14] : memref<560x128xf32, #tpu.memory_space<vmem>>, vector<128x128xf32>
      %c392 = arith.constant 392 : index
      %c0_15 = arith.constant 0 : index
      %23 = vector.load %arg3[%c392, %c0_15] : memref<560x128xf32, #tpu.memory_space<vmem>>, vector<1x128xf32>
      %c400 = arith.constant 400 : index
      %c0_16 = arith.constant 0 : index
      %24 = vector.load %arg3[%c400, %c0_16] : memref<560x128xf32, #tpu.memory_space<vmem>>, vector<1x128xf32>
      %c408 = arith.constant 408 : index
      %c0_17 = arith.constant 0 : index
      %25 = vector.load %arg3[%c408, %c0_17] : memref<560x128xf32, #tpu.memory_space<vmem>>, vector<1x128xf32>
      %c416 = arith.constant 416 : index
      %c0_18 = arith.constant 0 : index
      %26 = vector.load %arg3[%c416, %c0_18] : memref<560x128xf32, #tpu.memory_space<vmem>>, vector<128x128xf32>
      %c544 = arith.constant 544 : index
      %c0_19 = arith.constant 0 : index
      %27 = vector.load %arg3[%c544, %c0_19] : memref<560x128xf32, #tpu.memory_space<vmem>>, vector<1x128xf32>
      %28 = arith.truncf %21 : vector<16x128xf32> to vector<16x128xbf16>
      %29 = arith.truncf %22 : vector<128x128xf32> to vector<128x128xbf16>
      %cst_20 = arith.constant dense<0.000000e+00> : vector<16x128xf32>
      %30 = tpu.matmul %28, %29, %cst_20 {dimension_numbers = #tpu.dot_dimension_numbers<[1], [0], [0], [1], [0, 0, 1, 1], [], []>} : vector<16x128xbf16>, vector<128x128xbf16>, vector<16x128xf32> -> vector<16x128xf32>
      %31 = vector.broadcast %23 : vector<1x128xf32> to vector<16x128xf32>
      %32 = arith.addf %30, %31 : vector<16x128xf32>
      %33 = vector.extract_strided_slice %32 {offsets = [0, 0], sizes = [8, 128], strides = [1, 1]} : vector<16x128xf32> to vector<8x128xf32>
      %cst_21 = arith.constant dense<0.000000e+00> : vector<128xf32>
      %34 = vector.multi_reduction <add>, %33, %cst_21 [0] : vector<8x128xf32> to vector<128xf32>
      %35 = vector.shape_cast %34 : vector<128xf32> to vector<1x128xf32>
      %cst_22 = arith.constant 8.000000e+00 : f32
      %36 = vector.broadcast %cst_22 : f32 to vector<1x128xf32>
      %37 = arith.divf %35, %36 : vector<1x128xf32>
      %38 = arith.mulf %33, %33 : vector<8x128xf32>
      %cst_23 = arith.constant dense<0.000000e+00> : vector<128xf32>
      %39 = vector.multi_reduction <add>, %38, %cst_23 [0] : vector<8x128xf32> to vector<128xf32>
      %40 = vector.shape_cast %39 : vector<128xf32> to vector<1x128xf32>
      %cst_24 = arith.constant 8.000000e+00 : f32
      %41 = vector.broadcast %cst_24 : f32 to vector<1x128xf32>
      %42 = arith.divf %40, %41 : vector<1x128xf32>
      %43 = arith.mulf %37, %37 : vector<1x128xf32>
      %44 = arith.subf %42, %43 : vector<1x128xf32>
      %45 = vector.broadcast %37 : vector<1x128xf32> to vector<8x128xf32>
      %46 = arith.subf %33, %45 : vector<8x128xf32>
      %cst_25 = arith.constant 9.99999974E-6 : f32
      %47 = vector.broadcast %cst_25 : f32 to vector<1x128xf32>
      %48 = arith.addf %44, %47 : vector<1x128xf32>
      %49 = math.rsqrt %48 : vector<1x128xf32>
      %50 = vector.broadcast %49 : vector<1x128xf32> to vector<8x128xf32>
      %51 = arith.mulf %46, %50 : vector<8x128xf32>
      %52 = vector.broadcast %24 : vector<1x128xf32> to vector<8x128xf32>
      %53 = arith.mulf %52, %51 : vector<8x128xf32>
      %54 = vector.broadcast %25 : vector<1x128xf32> to vector<8x128xf32>
      %55 = arith.addf %53, %54 : vector<8x128xf32>
      %cst_26 = arith.constant 0.000000e+00 : f32
      %56 = vector.broadcast %cst_26 : f32 to vector<8x128xf32>
      %57 = arith.maximumf %55, %56 : vector<8x128xf32>
      %58 = vector.extract_strided_slice %32 {offsets = [8, 0], sizes = [8, 128], strides = [1, 1]} : vector<16x128xf32> to vector<8x128xf32>
      %cst_27 = arith.constant dense<0.000000e+00> : vector<128xf32>
      %59 = vector.multi_reduction <add>, %58, %cst_27 [0] : vector<8x128xf32> to vector<128xf32>
      %60 = vector.shape_cast %59 : vector<128xf32> to vector<1x128xf32>
      %cst_28 = arith.constant 8.000000e+00 : f32
      %61 = vector.broadcast %cst_28 : f32 to vector<1x128xf32>
      %62 = arith.divf %60, %61 : vector<1x128xf32>
      %63 = arith.mulf %58, %58 : vector<8x128xf32>
      %cst_29 = arith.constant dense<0.000000e+00> : vector<128xf32>
      %64 = vector.multi_reduction <add>, %63, %cst_29 [0] : vector<8x128xf32> to vector<128xf32>
      %65 = vector.shape_cast %64 : vector<128xf32> to vector<1x128xf32>
      %cst_30 = arith.constant 8.000000e+00 : f32
      %66 = vector.broadcast %cst_30 : f32 to vector<1x128xf32>
      %67 = arith.divf %65, %66 : vector<1x128xf32>
      %68 = arith.mulf %62, %62 : vector<1x128xf32>
      %69 = arith.subf %67, %68 : vector<1x128xf32>
      %70 = vector.broadcast %62 : vector<1x128xf32> to vector<8x128xf32>
      %71 = arith.subf %58, %70 : vector<8x128xf32>
      %cst_31 = arith.constant 9.99999974E-6 : f32
      %72 = vector.broadcast %cst_31 : f32 to vector<1x128xf32>
      %73 = arith.addf %69, %72 : vector<1x128xf32>
      %74 = math.rsqrt %73 : vector<1x128xf32>
      %75 = vector.broadcast %74 : vector<1x128xf32> to vector<8x128xf32>
      %76 = arith.mulf %71, %75 : vector<8x128xf32>
      %77 = vector.broadcast %24 : vector<1x128xf32> to vector<8x128xf32>
      %78 = arith.mulf %77, %76 : vector<8x128xf32>
      %79 = vector.broadcast %25 : vector<1x128xf32> to vector<8x128xf32>
      %80 = arith.addf %78, %79 : vector<8x128xf32>
      %cst_32 = arith.constant 0.000000e+00 : f32
      %81 = vector.broadcast %cst_32 : f32 to vector<8x128xf32>
      %82 = arith.maximumf %80, %81 : vector<8x128xf32>
      %83 = tpu.concatenate %57, %82 in 0 : vector<8x128xf32>, vector<8x128xf32> -> vector<16x128xf32>
      %84 = arith.truncf %83 : vector<16x128xf32> to vector<16x128xbf16>
      %85 = arith.truncf %26 : vector<128x128xf32> to vector<128x128xbf16>
      %cst_33 = arith.constant dense<0.000000e+00> : vector<16x128xf32>
      %86 = tpu.matmul %84, %85, %cst_33 {dimension_numbers = #tpu.dot_dimension_numbers<[1], [0], [0], [1], [0, 0, 1, 1], [], []>} : vector<16x128xbf16>, vector<128x128xbf16>, vector<16x128xf32> -> vector<16x128xf32>
      %87 = vector.broadcast %27 : vector<1x128xf32> to vector<16x128xf32>
      %88 = arith.addf %86, %87 : vector<16x128xf32>
      %c0_34 = arith.constant 0 : index
      %c0_35 = arith.constant 0 : index
      %89 = vector.load %arg4[%c0_34, %c0_35] : memref<288x128xf32, #tpu.memory_space<vmem>>, vector<128x128xf32>
      %c128 = arith.constant 128 : index
      %c0_36 = arith.constant 0 : index
      %90 = vector.load %arg4[%c128, %c0_36] : memref<288x128xf32, #tpu.memory_space<vmem>>, vector<1x128xf32>
      %c136 = arith.constant 136 : index
      %c0_37 = arith.constant 0 : index
      %91 = vector.load %arg4[%c136, %c0_37] : memref<288x128xf32, #tpu.memory_space<vmem>>, vector<1x128xf32>
      %c144 = arith.constant 144 : index
      %c0_38 = arith.constant 0 : index
      %92 = vector.load %arg4[%c144, %c0_38] : memref<288x128xf32, #tpu.memory_space<vmem>>, vector<1x128xf32>
      %c152 = arith.constant 152 : index
      %c0_39 = arith.constant 0 : index
      %93 = vector.load %arg4[%c152, %c0_39] : memref<288x128xf32, #tpu.memory_space<vmem>>, vector<128x128xf32>
      %c280 = arith.constant 280 : index
      %c0_40 = arith.constant 0 : index
      %94 = vector.load %arg4[%c280, %c0_40] : memref<288x128xf32, #tpu.memory_space<vmem>>, vector<1x128xf32>
      %95 = arith.truncf %88 : vector<16x128xf32> to vector<16x128xbf16>
      %96 = arith.truncf %89 : vector<128x128xf32> to vector<128x128xbf16>
      %cst_41 = arith.constant dense<0.000000e+00> : vector<16x128xf32>
      %97 = tpu.matmul %95, %96, %cst_41 {dimension_numbers = #tpu.dot_dimension_numbers<[1], [0], [0], [1], [0, 0, 1, 1], [], []>} : vector<16x128xbf16>, vector<128x128xbf16>, vector<16x128xf32> -> vector<16x128xf32>
      %98 = vector.broadcast %90 : vector<1x128xf32> to vector<16x128xf32>
      %99 = arith.addf %97, %98 : vector<16x128xf32>
      %100 = vector.extract_strided_slice %99 {offsets = [0, 0], sizes = [8, 128], strides = [1, 1]} : vector<16x128xf32> to vector<8x128xf32>
      %cst_42 = arith.constant dense<0.000000e+00> : vector<128xf32>
      %101 = vector.multi_reduction <add>, %100, %cst_42 [0] : vector<8x128xf32> to vector<128xf32>
      %102 = vector.shape_cast %101 : vector<128xf32> to vector<1x128xf32>
      %cst_43 = arith.constant 8.000000e+00 : f32
      %103 = vector.broadcast %cst_43 : f32 to vector<1x128xf32>
      %104 = arith.divf %102, %103 : vector<1x128xf32>
      %105 = arith.mulf %100, %100 : vector<8x128xf32>
      %cst_44 = arith.constant dense<0.000000e+00> : vector<128xf32>
      %106 = vector.multi_reduction <add>, %105, %cst_44 [0] : vector<8x128xf32> to vector<128xf32>
      %107 = vector.shape_cast %106 : vector<128xf32> to vector<1x128xf32>
      %cst_45 = arith.constant 8.000000e+00 : f32
      %108 = vector.broadcast %cst_45 : f32 to vector<1x128xf32>
      %109 = arith.divf %107, %108 : vector<1x128xf32>
      %110 = arith.mulf %104, %104 : vector<1x128xf32>
      %111 = arith.subf %109, %110 : vector<1x128xf32>
      %112 = vector.broadcast %104 : vector<1x128xf32> to vector<8x128xf32>
      %113 = arith.subf %100, %112 : vector<8x128xf32>
      %cst_46 = arith.constant 9.99999974E-6 : f32
      %114 = vector.broadcast %cst_46 : f32 to vector<1x128xf32>
      %115 = arith.addf %111, %114 : vector<1x128xf32>
      %116 = math.rsqrt %115 : vector<1x128xf32>
      %117 = vector.broadcast %116 : vector<1x128xf32> to vector<8x128xf32>
      %118 = arith.mulf %113, %117 : vector<8x128xf32>
      %119 = vector.broadcast %91 : vector<1x128xf32> to vector<8x128xf32>
      %120 = arith.mulf %119, %118 : vector<8x128xf32>
      %121 = vector.broadcast %92 : vector<1x128xf32> to vector<8x128xf32>
      %122 = arith.addf %120, %121 : vector<8x128xf32>
      %cst_47 = arith.constant 0.000000e+00 : f32
      %123 = vector.broadcast %cst_47 : f32 to vector<8x128xf32>
      %124 = arith.maximumf %122, %123 : vector<8x128xf32>
      %125 = vector.extract_strided_slice %99 {offsets = [8, 0], sizes = [8, 128], strides = [1, 1]} : vector<16x128xf32> to vector<8x128xf32>
      %cst_48 = arith.constant dense<0.000000e+00> : vector<128xf32>
      %126 = vector.multi_reduction <add>, %125, %cst_48 [0] : vector<8x128xf32> to vector<128xf32>
      %127 = vector.shape_cast %126 : vector<128xf32> to vector<1x128xf32>
      %cst_49 = arith.constant 8.000000e+00 : f32
      %128 = vector.broadcast %cst_49 : f32 to vector<1x128xf32>
      %129 = arith.divf %127, %128 : vector<1x128xf32>
      %130 = arith.mulf %125, %125 : vector<8x128xf32>
      %cst_50 = arith.constant dense<0.000000e+00> : vector<128xf32>
      %131 = vector.multi_reduction <add>, %130, %cst_50 [0] : vector<8x128xf32> to vector<128xf32>
      %132 = vector.shape_cast %131 : vector<128xf32> to vector<1x128xf32>
      %cst_51 = arith.constant 8.000000e+00 : f32
      %133 = vector.broadcast %cst_51 : f32 to vector<1x128xf32>
      %134 = arith.divf %132, %133 : vector<1x128xf32>
      %135 = arith.mulf %129, %129 : vector<1x128xf32>
      %136 = arith.subf %134, %135 : vector<1x128xf32>
      %137 = vector.broadcast %129 : vector<1x128xf32> to vector<8x128xf32>
      %138 = arith.subf %125, %137 : vector<8x128xf32>
      %cst_52 = arith.constant 9.99999974E-6 : f32
      %139 = vector.broadcast %cst_52 : f32 to vector<1x128xf32>
      %140 = arith.addf %136, %139 : vector<1x128xf32>
      %141 = math.rsqrt %140 : vector<1x128xf32>
      %142 = vector.broadcast %141 : vector<1x128xf32> to vector<8x128xf32>
      %143 = arith.mulf %138, %142 : vector<8x128xf32>
      %144 = vector.broadcast %91 : vector<1x128xf32> to vector<8x128xf32>
      %145 = arith.mulf %144, %143 : vector<8x128xf32>
      %146 = vector.broadcast %92 : vector<1x128xf32> to vector<8x128xf32>
      %147 = arith.addf %145, %146 : vector<8x128xf32>
      %cst_53 = arith.constant 0.000000e+00 : f32
      %148 = vector.broadcast %cst_53 : f32 to vector<8x128xf32>
      %149 = arith.maximumf %147, %148 : vector<8x128xf32>
      %150 = tpu.concatenate %124, %149 in 0 : vector<8x128xf32>, vector<8x128xf32> -> vector<16x128xf32>
      %151 = arith.truncf %150 : vector<16x128xf32> to vector<16x128xbf16>
      %152 = arith.truncf %93 : vector<128x128xf32> to vector<128x128xbf16>
      %cst_54 = arith.constant dense<0.000000e+00> : vector<16x128xf32>
      %153 = tpu.matmul %151, %152, %cst_54 {dimension_numbers = #tpu.dot_dimension_numbers<[1], [0], [0], [1], [0, 0, 1, 1], [], []>} : vector<16x128xbf16>, vector<128x128xbf16>, vector<16x128xf32> -> vector<16x128xf32>
      %154 = vector.broadcast %94 : vector<1x128xf32> to vector<16x128xf32>
      %155 = arith.addf %153, %154 : vector<16x128xf32>
      %156 = vector.extract_strided_slice %155 {offsets = [0, 0], sizes = [8, 128], strides = [1, 1]} : vector<16x128xf32> to vector<8x128xf32>
      %157 = vector.extract_strided_slice %155 {offsets = [8, 0], sizes = [8, 128], strides = [1, 1]} : vector<16x128xf32> to vector<8x128xf32>
      %158 = tpu.concatenate %156, %157 in 1 : vector<8x128xf32>, vector<8x128xf32> -> vector<8x256xf32>
      %c0_55 = arith.constant 0 : index
      %c0_56 = arith.constant 0 : index
      %c0_57 = arith.constant 0 : index
      %159 = vector.load %arg6[%c0_55, %c0_56, %c0_57] : memref<1x8x256xf32, #tpu.memory_space<vmem>>, vector<1x8x256xf32>
      %160 = vector.shape_cast %159 : vector<1x8x256xf32> to vector<8x256xf32>
      %161 = vector.shape_cast %158 : vector<8x256xf32> to vector<1x8x256xf32>
      tpu.vector_store %arg6[%c0_55, %c0_56, %c0_57], %161 {strides = array<i32>} : memref<1x8x256xf32, #tpu.memory_space<vmem>>, vector<1x8x256xf32>,
    } else {
    }
    %c1_i32 = arith.constant 1 : i32
    %3 = arith.cmpi eq, %arg0, %c1_i32 : i32
    %4 = arith.extui %3 : i1 to i32
    %c0_i32_1 = arith.constant 0 : i32
    %5 = arith.cmpi ne, %4, %c0_i32_1 : i32
    scf.if %5 {
      %c280 = arith.constant 280 : index
      %c0 = arith.constant 0 : index
      %6 = vector.load %arg2[%c280, %c0] : memref<560x128xf32, #tpu.memory_space<vmem>>, vector<280x128xf32>
      %cst = arith.constant 0.998000979 : f32
      %7 = vector.broadcast %cst : f32 to vector<280x128xf32>
      %8 = arith.mulf %6, %7 : vector<280x128xf32>
      %c280_2 = arith.constant 280 : index
      %c0_3 = arith.constant 0 : index
      %9 = vector.load %arg3[%c280_2, %c0_3] : memref<560x128xf32, #tpu.memory_space<vmem>>, vector<280x128xf32>
      %cst_4 = arith.constant 1.999000e-03 : f32
      %10 = vector.broadcast %cst_4 : f32 to vector<280x128xf32>
      %11 = arith.mulf %9, %10 : vector<280x128xf32>
      %12 = arith.addf %8, %11 : vector<280x128xf32>
      %c0_5 = arith.constant 0 : index
      %c0_6 = arith.constant 0 : index
      %13 = vector.load %arg5[%c0_5, %c0_6] : memref<280x128xf32, #tpu.memory_space<vmem>>, vector<280x128xf32>
      tpu.vector_store %arg5[%c0_5, %c0_6], %12 {strides = array<i32>} : memref<280x128xf32, #tpu.memory_space<vmem>>, vector<280x128xf32>,
      %c0_7 = arith.constant 0 : index
      %c0_8 = arith.constant 0 : index
      %14 = vector.load %arg1[%c0_7, %c0_8] : memref<16x256xf32, #tpu.memory_space<vmem>>, vector<8x256xf32>
      %c8 = arith.constant 8 : index
      %c0_9 = arith.constant 0 : index
      %15 = vector.load %arg1[%c8, %c0_9] : memref<16x256xf32, #tpu.memory_space<vmem>>, vector<8x256xf32>
      %c0_10 = arith.constant 0 : index
      %c0_11 = arith.constant 0 : index
      %16 = vector.load %arg2[%c0_10, %c0_11] : memref<560x128xf32, #tpu.memory_space<vmem>>, vector<256x128xf32>
      %cst_12 = arith.constant 9.990000e-01 : f32
      %17 = vector.broadcast %cst_12 : f32 to vector<256x128xf32>
      %18 = arith.mulf %16, %17 : vector<256x128xf32>
      %c0_13 = arith.constant 0 : index
      %c0_14 = arith.constant 0 : index
      %19 = vector.load %arg3[%c0_13, %c0_14] : memref<560x128xf32, #tpu.memory_space<vmem>>, vector<256x128xf32>
      %cst_15 = arith.constant 1.000000e-03 : f32
      %20 = vector.broadcast %cst_15 : f32 to vector<256x128xf32>
      %21 = arith.mulf %19, %20 : vector<256x128xf32>
      %22 = arith.addf %18, %21 : vector<256x128xf32>
      %23 = arith.truncf %15 : vector<8x256xf32> to vector<8x256xbf16>
      %24 = arith.truncf %22 : vector<256x128xf32> to vector<256x128xbf16>
      %cst_16 = arith.constant dense<0.000000e+00> : vector<8x128xf32>
      %25 = tpu.matmul %23, %24, %cst_16 {dimension_numbers = #tpu.dot_dimension_numbers<[1], [0], [0], [1], [0, 0, 1, 1], [], []>} : vector<8x256xbf16>, vector<256x128xbf16>, vector<8x128xf32> -> vector<8x128xf32>
      %c256 = arith.constant 256 : index
      %c0_17 = arith.constant 0 : index
      %26 = vector.load %arg2[%c256, %c0_17] : memref<560x128xf32, #tpu.memory_space<vmem>>, vector<1x128xf32>
      %cst_18 = arith.constant 9.990000e-01 : f32
      %27 = vector.broadcast %cst_18 : f32 to vector<1x128xf32>
      %28 = arith.mulf %26, %27 : vector<1x128xf32>
      %c256_19 = arith.constant 256 : index
      %c0_20 = arith.constant 0 : index
      %29 = vector.load %arg3[%c256_19, %c0_20] : memref<560x128xf32, #tpu.memory_space<vmem>>, vector<1x128xf32>
      %cst_21 = arith.constant 1.000000e-03 : f32
      %30 = vector.broadcast %cst_21 : f32 to vector<1x128xf32>
      %31 = arith.mulf %29, %30 : vector<1x128xf32>
      %32 = arith.addf %28, %31 : vector<1x128xf32>
      %33 = vector.broadcast %32 : vector<1x128xf32> to vector<8x128xf32>
      %34 = arith.addf %25, %33 : vector<8x128xf32>
      %c264 = arith.constant 264 : index
      %c0_22 = arith.constant 0 : index
      %35 = vector.load %arg2[%c264, %c0_22] : memref<560x128xf32, #tpu.memory_space<vmem>>, vector<128x128xf32>
      %cst_23 = arith.constant 9.990000e-01 : f32
      %36 = vector.broadcast %cst_23 : f32 to vector<128x128xf32>
      %37 = arith.mulf %35, %36 : vector<128x128xf32>
      %c264_24 = arith.constant 264 : index
      %c0_25 = arith.constant 0 : index
      %38 = vector.load %arg3[%c264_24, %c0_25] : memref<560x128xf32, #tpu.memory_space<vmem>>, vector<128x128xf32>
      %cst_26 = arith.constant 1.000000e-03 : f32
      %39 = vector.broadcast %cst_26 : f32 to vector<128x128xf32>
      %40 = arith.mulf %38, %39 : vector<128x128xf32>
      %41 = arith.addf %37, %40 : vector<128x128xf32>
      %c392 = arith.constant 392 : index
      %c0_27 = arith.constant 0 : index
      %42 = vector.load %arg2[%c392, %c0_27] : memref<560x128xf32, #tpu.memory_space<vmem>>, vector<1x128xf32>
      %cst_28 = arith.constant 9.990000e-01 : f32
      %43 = vector.broadcast %cst_28 : f32 to vector<1x128xf32>
      %44 = arith.mulf %42, %43 : vector<1x128xf32>
      %c392_29 = arith.constant 392 : index
      %c0_30 = arith.constant 0 : index
      %45 = vector.load %arg3[%c392_29, %c0_30] : memref<560x128xf32, #tpu.memory_space<vmem>>, vector<1x128xf32>
      %cst_31 = arith.constant 1.000000e-03 : f32
      %46 = vector.broadcast %cst_31 : f32 to vector<1x128xf32>
      %47 = arith.mulf %45, %46 : vector<1x128xf32>
      %48 = arith.addf %44, %47 : vector<1x128xf32>
      %c400 = arith.constant 400 : index
      %c0_32 = arith.constant 0 : index
      %49 = vector.load %arg2[%c400, %c0_32] : memref<560x128xf32, #tpu.memory_space<vmem>>, vector<1x128xf32>
      %cst_33 = arith.constant 9.990000e-01 : f32
      %50 = vector.broadcast %cst_33 : f32 to vector<1x128xf32>
      %51 = arith.mulf %49, %50 : vector<1x128xf32>
      %c400_34 = arith.constant 400 : index
      %c0_35 = arith.constant 0 : index
      %52 = vector.load %arg3[%c400_34, %c0_35] : memref<560x128xf32, #tpu.memory_space<vmem>>, vector<1x128xf32>
      %cst_36 = arith.constant 1.000000e-03 : f32
      %53 = vector.broadcast %cst_36 : f32 to vector<1x128xf32>
      %54 = arith.mulf %52, %53 : vector<1x128xf32>
      %55 = arith.addf %51, %54 : vector<1x128xf32>
      %c408 = arith.constant 408 : index
      %c0_37 = arith.constant 0 : index
      %56 = vector.load %arg2[%c408, %c0_37] : memref<560x128xf32, #tpu.memory_space<vmem>>, vector<1x128xf32>
      %cst_38 = arith.constant 9.990000e-01 : f32
      %57 = vector.broadcast %cst_38 : f32 to vector<1x128xf32>
      %58 = arith.mulf %56, %57 : vector<1x128xf32>
      %c408_39 = arith.constant 408 : index
      %c0_40 = arith.constant 0 : index
      %59 = vector.load %arg3[%c408_39, %c0_40] : memref<560x128xf32, #tpu.memory_space<vmem>>, vector<1x128xf32>
      %cst_41 = arith.constant 1.000000e-03 : f32
      %60 = vector.broadcast %cst_41 : f32 to vector<1x128xf32>
      %61 = arith.mulf %59, %60 : vector<1x128xf32>
      %62 = arith.addf %58, %61 : vector<1x128xf32>
      %c416 = arith.constant 416 : index
      %c0_42 = arith.constant 0 : index
      %63 = vector.load %arg2[%c416, %c0_42] : memref<560x128xf32, #tpu.memory_space<vmem>>, vector<128x128xf32>
      %cst_43 = arith.constant 9.990000e-01 : f32
      %64 = vector.broadcast %cst_43 : f32 to vector<128x128xf32>
      %65 = arith.mulf %63, %64 : vector<128x128xf32>
      %c416_44 = arith.constant 416 : index
      %c0_45 = arith.constant 0 : index
      %66 = vector.load %arg3[%c416_44, %c0_45] : memref<560x128xf32, #tpu.memory_space<vmem>>, vector<128x128xf32>
      %cst_46 = arith.constant 1.000000e-03 : f32
      %67 = vector.broadcast %cst_46 : f32 to vector<128x128xf32>
      %68 = arith.mulf %66, %67 : vector<128x128xf32>
      %69 = arith.addf %65, %68 : vector<128x128xf32>
      %c544 = arith.constant 544 : index
      %c0_47 = arith.constant 0 : index
      %70 = vector.load %arg2[%c544, %c0_47] : memref<560x128xf32, #tpu.memory_space<vmem>>, vector<1x128xf32>
      %cst_48 = arith.constant 9.990000e-01 : f32
      %71 = vector.broadcast %cst_48 : f32 to vector<1x128xf32>
      %72 = arith.mulf %70, %71 : vector<1x128xf32>
      %c544_49 = arith.constant 544 : index
      %c0_50 = arith.constant 0 : index
      %73 = vector.load %arg3[%c544_49, %c0_50] : memref<560x128xf32, #tpu.memory_space<vmem>>, vector<1x128xf32>
      %cst_51 = arith.constant 1.000000e-03 : f32
      %74 = vector.broadcast %cst_51 : f32 to vector<1x128xf32>
      %75 = arith.mulf %73, %74 : vector<1x128xf32>
      %76 = arith.addf %72, %75 : vector<1x128xf32>
      %77 = arith.truncf %34 : vector<8x128xf32> to vector<8x128xbf16>
      %78 = arith.truncf %41 : vector<128x128xf32> to vector<128x128xbf16>
      %cst_52 = arith.constant dense<0.000000e+00> : vector<8x128xf32>
      %79 = tpu.matmul %77, %78, %cst_52 {dimension_numbers = #tpu.dot_dimension_numbers<[1], [0], [0], [1], [0, 0, 1, 1], [], []>} : vector<8x128xbf16>, vector<128x128xbf16>, vector<8x128xf32> -> vector<8x128xf32>
      %80 = vector.broadcast %48 : vector<1x128xf32> to vector<8x128xf32>
      %81 = arith.addf %79, %80 : vector<8x128xf32>
      %cst_53 = arith.constant dense<0.000000e+00> : vector<128xf32>
      %82 = vector.multi_reduction <add>, %81, %cst_53 [0] : vector<8x128xf32> to vector<128xf32>
      %83 = vector.shape_cast %82 : vector<128xf32> to vector<1x128xf32>
      %cst_54 = arith.constant 8.000000e+00 : f32
      %84 = vector.broadcast %cst_54 : f32 to vector<1x128xf32>
      %85 = arith.divf %83, %84 : vector<1x128xf32>
      %86 = arith.mulf %81, %81 : vector<8x128xf32>
      %cst_55 = arith.constant dense<0.000000e+00> : vector<128xf32>
      %87 = vector.multi_reduction <add>, %86, %cst_55 [0] : vector<8x128xf32> to vector<128xf32>
      %88 = vector.shape_cast %87 : vector<128xf32> to vector<1x128xf32>
      %cst_56 = arith.constant 8.000000e+00 : f32
      %89 = vector.broadcast %cst_56 : f32 to vector<1x128xf32>
      %90 = arith.divf %88, %89 : vector<1x128xf32>
      %91 = arith.mulf %85, %85 : vector<1x128xf32>
      %92 = arith.subf %90, %91 : vector<1x128xf32>
      %93 = vector.broadcast %85 : vector<1x128xf32> to vector<8x128xf32>
      %94 = arith.subf %81, %93 : vector<8x128xf32>
      %cst_57 = arith.constant 9.99999974E-6 : f32
      %95 = vector.broadcast %cst_57 : f32 to vector<1x128xf32>
      %96 = arith.addf %92, %95 : vector<1x128xf32>
      %97 = math.rsqrt %96 : vector<1x128xf32>
      %98 = vector.broadcast %97 : vector<1x128xf32> to vector<8x128xf32>
      %99 = arith.mulf %94, %98 : vector<8x128xf32>
      %100 = vector.broadcast %55 : vector<1x128xf32> to vector<8x128xf32>
      %101 = arith.mulf %100, %99 : vector<8x128xf32>
      %102 = vector.broadcast %62 : vector<1x128xf32> to vector<8x128xf32>
      %103 = arith.addf %101, %102 : vector<8x128xf32>
      %cst_58 = arith.constant 0.000000e+00 : f32
      %104 = vector.broadcast %cst_58 : f32 to vector<8x128xf32>
      %105 = arith.maximumf %103, %104 : vector<8x128xf32>
      %106 = arith.truncf %105 : vector<8x128xf32> to vector<8x128xbf16>
      %107 = arith.truncf %69 : vector<128x128xf32> to vector<128x128xbf16>
      %cst_59 = arith.constant dense<0.000000e+00> : vector<8x128xf32>
      %108 = tpu.matmul %106, %107, %cst_59 {dimension_numbers = #tpu.dot_dimension_numbers<[1], [0], [0], [1], [0, 0, 1, 1], [], []>} : vector<8x128xbf16>, vector<128x128xbf16>, vector<8x128xf32> -> vector<8x128xf32>
      %109 = vector.broadcast %76 : vector<1x128xf32> to vector<8x128xf32>
      %110 = arith.addf %108, %109 : vector<8x128xf32>
      %c0_60 = arith.constant 0 : index
      %c0_61 = arith.constant 0 : index
      %111 = vector.load %arg2[%c0_60, %c0_61] : memref<560x128xf32, #tpu.memory_space<vmem>>, vector<256x128xf32>
      %cst_62 = arith.constant 0.998000979 : f32
      %112 = vector.broadcast %cst_62 : f32 to vector<256x128xf32>
      %113 = arith.mulf %111, %112 : vector<256x128xf32>
      %c0_63 = arith.constant 0 : index
      %c0_64 = arith.constant 0 : index
      %114 = vector.load %arg3[%c0_63, %c0_64] : memref<560x128xf32, #tpu.memory_space<vmem>>, vector<256x128xf32>
      %cst_65 = arith.constant 1.999000e-03 : f32
      %115 = vector.broadcast %cst_65 : f32 to vector<256x128xf32>
      %116 = arith.mulf %114, %115 : vector<256x128xf32>
      %117 = arith.addf %113, %116 : vector<256x128xf32>
      %118 = arith.truncf %14 : vector<8x256xf32> to vector<8x256xbf16>
      %119 = arith.truncf %117 : vector<256x128xf32> to vector<256x128xbf16>
      %cst_66 = arith.constant dense<0.000000e+00> : vector<8x128xf32>
      %120 = tpu.matmul %118, %119, %cst_66 {dimension_numbers = #tpu.dot_dimension_numbers<[1], [0], [0], [1], [0, 0, 1, 1], [], []>} : vector<8x256xbf16>, vector<256x128xbf16>, vector<8x128xf32> -> vector<8x128xf32>
      %c256_67 = arith.constant 256 : index
      %c0_68 = arith.constant 0 : index
      %121 = vector.load %arg2[%c256_67, %c0_68] : memref<560x128xf32, #tpu.memory_space<vmem>>, vector<1x128xf32>
      %cst_69 = arith.constant 0.998000979 : f32
      %122 = vector.broadcast %cst_69 : f32 to vector<1x128xf32>
      %123 = arith.mulf %121, %122 : vector<1x128xf32>
      %c256_70 = arith.constant 256 : index
      %c0_71 = arith.constant 0 : index
      %124 = vector.load %arg3[%c256_70, %c0_71] : memref<560x128xf32, #tpu.memory_space<vmem>>, vector<1x128xf32>
      %cst_72 = arith.constant 1.999000e-03 : f32
      %125 = vector.broadcast %cst_72 : f32 to vector<1x128xf32>
      %126 = arith.mulf %124, %125 : vector<1x128xf32>
      %127 = arith.addf %123, %126 : vector<1x128xf32>
      %128 = vector.broadcast %127 : vector<1x128xf32> to vector<8x128xf32>
      %129 = arith.addf %120, %128 : vector<8x128xf32>
      %c264_73 = arith.constant 264 : index
      %c0_74 = arith.constant 0 : index
      %130 = vector.load %arg2[%c264_73, %c0_74] : memref<560x128xf32, #tpu.memory_space<vmem>>, vector<128x128xf32>
      %cst_75 = arith.constant 0.998000979 : f32
      %131 = vector.broadcast %cst_75 : f32 to vector<128x128xf32>
      %132 = arith.mulf %130, %131 : vector<128x128xf32>
      %c264_76 = arith.constant 264 : index
      %c0_77 = arith.constant 0 : index
      %133 = vector.load %arg3[%c264_76, %c0_77] : memref<560x128xf32, #tpu.memory_space<vmem>>, vector<128x128xf32>
      %cst_78 = arith.constant 1.999000e-03 : f32
      %134 = vector.broadcast %cst_78 : f32 to vector<128x128xf32>
      %135 = arith.mulf %133, %134 : vector<128x128xf32>
      %136 = arith.addf %132, %135 : vector<128x128xf32>
      %c392_79 = arith.constant 392 : index
      %c0_80 = arith.constant 0 : index
      %137 = vector.load %arg2[%c392_79, %c0_80] : memref<560x128xf32, #tpu.memory_space<vmem>>, vector<1x128xf32>
      %cst_81 = arith.constant 0.998000979 : f32
      %138 = vector.broadcast %cst_81 : f32 to vector<1x128xf32>
      %139 = arith.mulf %137, %138 : vector<1x128xf32>
      %c392_82 = arith.constant 392 : index
      %c0_83 = arith.constant 0 : index
      %140 = vector.load %arg3[%c392_82, %c0_83] : memref<560x128xf32, #tpu.memory_space<vmem>>, vector<1x128xf32>
      %cst_84 = arith.constant 1.999000e-03 : f32
      %141 = vector.broadcast %cst_84 : f32 to vector<1x128xf32>
      %142 = arith.mulf %140, %141 : vector<1x128xf32>
      %143 = arith.addf %139, %142 : vector<1x128xf32>
      %c400_85 = arith.constant 400 : index
      %c0_86 = arith.constant 0 : index
      %144 = vector.load %arg2[%c400_85, %c0_86] : memref<560x128xf32, #tpu.memory_space<vmem>>, vector<1x128xf32>
      %cst_87 = arith.constant 0.998000979 : f32
      %145 = vector.broadcast %cst_87 : f32 to vector<1x128xf32>
      %146 = arith.mulf %144, %145 : vector<1x128xf32>
      %c400_88 = arith.constant 400 : index
      %c0_89 = arith.constant 0 : index
      %147 = vector.load %arg3[%c400_88, %c0_89] : memref<560x128xf32, #tpu.memory_space<vmem>>, vector<1x128xf32>
      %cst_90 = arith.constant 1.999000e-03 : f32
      %148 = vector.broadcast %cst_90 : f32 to vector<1x128xf32>
      %149 = arith.mulf %147, %148 : vector<1x128xf32>
      %150 = arith.addf %146, %149 : vector<1x128xf32>
      %c408_91 = arith.constant 408 : index
      %c0_92 = arith.constant 0 : index
      %151 = vector.load %arg2[%c408_91, %c0_92] : memref<560x128xf32, #tpu.memory_space<vmem>>, vector<1x128xf32>
      %cst_93 = arith.constant 0.998000979 : f32
      %152 = vector.broadcast %cst_93 : f32 to vector<1x128xf32>
      %153 = arith.mulf %151, %152 : vector<1x128xf32>
      %c408_94 = arith.constant 408 : index
      %c0_95 = arith.constant 0 : index
      %154 = vector.load %arg3[%c408_94, %c0_95] : memref<560x128xf32, #tpu.memory_space<vmem>>, vector<1x128xf32>
      %cst_96 = arith.constant 1.999000e-03 : f32
      %155 = vector.broadcast %cst_96 : f32 to vector<1x128xf32>
      %156 = arith.mulf %154, %155 : vector<1x128xf32>
      %157 = arith.addf %153, %156 : vector<1x128xf32>
      %c416_97 = arith.constant 416 : index
      %c0_98 = arith.constant 0 : index
      %158 = vector.load %arg2[%c416_97, %c0_98] : memref<560x128xf32, #tpu.memory_space<vmem>>, vector<128x128xf32>
      %cst_99 = arith.constant 0.998000979 : f32
      %159 = vector.broadcast %cst_99 : f32 to vector<128x128xf32>
      %160 = arith.mulf %158, %159 : vector<128x128xf32>
      %c416_100 = arith.constant 416 : index
      %c0_101 = arith.constant 0 : index
      %161 = vector.load %arg3[%c416_100, %c0_101] : memref<560x128xf32, #tpu.memory_space<vmem>>, vector<128x128xf32>
      %cst_102 = arith.constant 1.999000e-03 : f32
      %162 = vector.broadcast %cst_102 : f32 to vector<128x128xf32>
      %163 = arith.mulf %161, %162 : vector<128x128xf32>
      %164 = arith.addf %160, %163 : vector<128x128xf32>
      %c544_103 = arith.constant 544 : index
      %c0_104 = arith.constant 0 : index
      %165 = vector.load %arg2[%c544_103, %c0_104] : memref<560x128xf32, #tpu.memory_space<vmem>>, vector<1x128xf32>
      %cst_105 = arith.constant 0.998000979 : f32
      %166 = vector.broadcast %cst_105 : f32 to vector<1x128xf32>
      %167 = arith.mulf %165, %166 : vector<1x128xf32>
      %c544_106 = arith.constant 544 : index
      %c0_107 = arith.constant 0 : index
      %168 = vector.load %arg3[%c544_106, %c0_107] : memref<560x128xf32, #tpu.memory_space<vmem>>, vector<1x128xf32>
      %cst_108 = arith.constant 1.999000e-03 : f32
      %169 = vector.broadcast %cst_108 : f32 to vector<1x128xf32>
      %170 = arith.mulf %168, %169 : vector<1x128xf32>
      %171 = arith.addf %167, %170 : vector<1x128xf32>
      %172 = arith.truncf %129 : vector<8x128xf32> to vector<8x128xbf16>
      %173 = arith.truncf %136 : vector<128x128xf32> to vector<128x128xbf16>
      %cst_109 = arith.constant dense<0.000000e+00> : vector<8x128xf32>
      %174 = tpu.matmul %172, %173, %cst_109 {dimension_numbers = #tpu.dot_dimension_numbers<[1], [0], [0], [1], [0, 0, 1, 1], [], []>} : vector<8x128xbf16>, vector<128x128xbf16>, vector<8x128xf32> -> vector<8x128xf32>
      %175 = vector.broadcast %143 : vector<1x128xf32> to vector<8x128xf32>
      %176 = arith.addf %174, %175 : vector<8x128xf32>
      %cst_110 = arith.constant dense<0.000000e+00> : vector<128xf32>
      %177 = vector.multi_reduction <add>, %176, %cst_110 [0] : vector<8x128xf32> to vector<128xf32>
      %178 = vector.shape_cast %177 : vector<128xf32> to vector<1x128xf32>
      %cst_111 = arith.constant 8.000000e+00 : f32
      %179 = vector.broadcast %cst_111 : f32 to vector<1x128xf32>
      %180 = arith.divf %178, %179 : vector<1x128xf32>
      %181 = arith.mulf %176, %176 : vector<8x128xf32>
      %cst_112 = arith.constant dense<0.000000e+00> : vector<128xf32>
      %182 = vector.multi_reduction <add>, %181, %cst_112 [0] : vector<8x128xf32> to vector<128xf32>
      %183 = vector.shape_cast %182 : vector<128xf32> to vector<1x128xf32>
      %cst_113 = arith.constant 8.000000e+00 : f32
      %184 = vector.broadcast %cst_113 : f32 to vector<1x128xf32>
      %185 = arith.divf %183, %184 : vector<1x128xf32>
      %186 = arith.mulf %180, %180 : vector<1x128xf32>
      %187 = arith.subf %185, %186 : vector<1x128xf32>
      %188 = vector.broadcast %180 : vector<1x128xf32> to vector<8x128xf32>
      %189 = arith.subf %176, %188 : vector<8x128xf32>
      %cst_114 = arith.constant 9.99999974E-6 : f32
      %190 = vector.broadcast %cst_114 : f32 to vector<1x128xf32>
      %191 = arith.addf %187, %190 : vector<1x128xf32>
      %192 = math.rsqrt %191 : vector<1x128xf32>
      %193 = vector.broadcast %192 : vector<1x128xf32> to vector<8x128xf32>
      %194 = arith.mulf %189, %193 : vector<8x128xf32>
      %195 = vector.broadcast %150 : vector<1x128xf32> to vector<8x128xf32>
      %196 = arith.mulf %195, %194 : vector<8x128xf32>
      %197 = vector.broadcast %157 : vector<1x128xf32> to vector<8x128xf32>
      %198 = arith.addf %196, %197 : vector<8x128xf32>
      %cst_115 = arith.constant 0.000000e+00 : f32
      %199 = vector.broadcast %cst_115 : f32 to vector<8x128xf32>
      %200 = arith.maximumf %198, %199 : vector<8x128xf32>
      %201 = arith.truncf %200 : vector<8x128xf32> to vector<8x128xbf16>
      %202 = arith.truncf %164 : vector<128x128xf32> to vector<128x128xbf16>
      %cst_116 = arith.constant dense<0.000000e+00> : vector<8x128xf32>
      %203 = tpu.matmul %201, %202, %cst_116 {dimension_numbers = #tpu.dot_dimension_numbers<[1], [0], [0], [1], [0, 0, 1, 1], [], []>} : vector<8x128xbf16>, vector<128x128xbf16>, vector<8x128xf32> -> vector<8x128xf32>
      %204 = vector.broadcast %171 : vector<1x128xf32> to vector<8x128xf32>
      %205 = arith.addf %203, %204 : vector<8x128xf32>
      %206 = tpu.concatenate %110, %205 in 1 : vector<8x128xf32>, vector<8x128xf32> -> vector<8x256xf32>
      %c0_117 = arith.constant 0 : index
      %c0_118 = arith.constant 0 : index
      %c0_119 = arith.constant 0 : index
      %207 = vector.load %arg6[%c0_117, %c0_118, %c0_119] : memref<1x8x256xf32, #tpu.memory_space<vmem>>, vector<1x8x256xf32>
      %208 = vector.shape_cast %207 : vector<1x8x256xf32> to vector<8x256xf32>
      %209 = vector.shape_cast %206 : vector<8x256xf32> to vector<1x8x256xf32>
      tpu.vector_store %arg6[%c0_117, %c0_118, %c0_119], %209 {strides = array<i32>} : memref<1x8x256xf32, #tpu.memory_space<vmem>>, vector<1x8x256xf32>,
    } else {
    }
    return
  }
  func.func @transform_0(%arg0: i32) -> (i32, i32) {
    %c0_i32 = arith.constant 0 : i32
    %c0_i32_0 = arith.constant 0 : i32
    %c0_i32_1 = arith.constant 0 : i32
    return %c0_i32, %c0_i32_0 : i32, i32
  }
  func.func @transform_1(%arg0: i32) -> (i32, i32) {
    %c0_i32 = arith.constant 0 : i32
    %c0_i32_0 = arith.constant 0 : i32
    %c0_i32_1 = arith.constant 0 : i32
    return %c0_i32, %c0_i32_0 : i32, i32
  }
  func.func @transform_2(%arg0: i32) -> (i32, i32) {
    %c0_i32 = arith.constant 0 : i32
    %c0_i32_0 = arith.constant 0 : i32
    %c0_i32_1 = arith.constant 0 : i32
    return %c0_i32, %c0_i32_0 : i32, i32
  }
  func.func @transform_3(%arg0: i32) -> (i32, i32) {
    %c0_i32 = arith.constant 0 : i32
    %c0_i32_0 = arith.constant 0 : i32
    %c0_i32_1 = arith.constant 0 : i32
    return %c0_i32, %c0_i32_0 : i32, i32
  }
  func.func @transform_4(%arg0: i32) -> (i32, i32) {
    %c0_i32 = arith.constant 0 : i32
    %c0_i32_0 = arith.constant 0 : i32
    return %arg0, %c0_i32 : i32, i32
  }
  func.func @transform_5(%arg0: i32) -> (i32, i32, i32) {
    %c0_i32 = arith.constant 0 : i32
    %c0_i32_0 = arith.constant 0 : i32
    %c0_i32_1 = arith.constant 0 : i32
    return %arg0, %c0_i32, %c0_i32_0 : i32, i32, i32
  }
}

</mosaic_0001>

<llo_original>
// kernel: _byol_forward.1
$region0: #{_byol_forward.1}
  #allocation0 [shape = 'u32[]', space=smem, size = 0x4, offset = 0x4, fixed_abs, tag = 'smem constant byte address 0x4 - core index']
  #allocation1 [shape = 'u32[72,128]{1,0:T(1,128)}', space=vmem, size = 0x9000, scoped, tag = 'internal scratch']
  %s0 = inlined_call_operand.vmem [shape: f32[16,256], index: 0, kind: input, shape index: {}]
  %s1 = inlined_call_operand.hbm [shape: f32[560,128], index: 1, kind: input, shape index: {}]
  %s2 = inlined_call_operand.hbm [shape: f32[560,128], index: 2, kind: input, shape index: {}]
  %s3 = inlined_call_operand.vmem [shape: f32[288,128], index: 3, kind: input, shape index: {}]
  %s4 = inlined_call_operand.hbm [shape: f32[560,128], index: 4, kind: output, shape index: {0}]
  %s5 = inlined_call_operand.vmem [shape: f32[2,8,256], index: 5, kind: output, shape index: {1}]
  %6 = xla_tuple %s4, %s5
  %s7 = sld [smem:[#allocation0]]
  $region73: #{_byol_forward.1} parent=0
    _
  %s9 = ssub.s32 1, %s7
  %s10 = scalar_select 0, %s9, %s7
  $region1: #{_byol_forward.1} parent=0
    #allocation2 [shape = 'u8[286720]{0}', space=vmem, size = 0x46000, scoped, tag = 'input window, operand 1, single buffered']
    #allocation3 [shape = 's32[2]{0}', space=sflag, size = 0x8, scoped, tag = 'scoped memory for _byol_forward.1']
    #allocation4 [shape = 's32[2]{0}', space=sflag, size = 0x8, scoped, tag = 'scoped memory for _byol_forward.1']
    #allocation5 [shape = 'u8[286720]{0}', space=vmem, size = 0x46000, scoped, tag = 'input window, operand 2, single buffered']
    #allocation6 [shape = 's32[1]{0}', space=sflag, size = 0x4, scoped, tag = 'scoped memory for _byol_forward.1']
    #allocation7 [shape = 'u8[286720]{0}', space=vmem, size = 0x46000, scoped, tag = 'output window, operand 0']
    %11 = vsyncpa [#allocation3], 0
    %12 = vsyncpa [#allocation6], 0
    %13 = vsyncpa [#allocation4], 0
    %s14 = scalar_lea.sflag [#allocation4], 1
    %15 = vsyncpa %s14, 0
    loop: start=0, step=1, limit=4
    $region2: #{_byol_forward.1} parent=1 // loop_pre_header
      _
    $region3: #{_byol_forward.1} parent=1 // loop_header
      %s17 = sphi 0, %s21
      %p18 = scmp.ge.s32.totalorder %s17, 4
      %s25 = sphi 0, %s25
      %s27 = sphi 0, %s25
      %s28 = sphi 0, %s27
      %s42 = sphi 0, %s28
      %s46 = sphi 0, %s46
      %s48 = sphi 0, %s46
      %s49 = sphi 0, %s48
      %s63 = sphi 0, %s49
      %s67 = sphi 0, %s67
      %s69 = sphi 0, %s67
      %s70 = sphi 0, %s69
      %s84 = sphi 0, %s70
      %s88 = sphi 0, %s88
      %s90 = sphi 0, %s88
      %s91 = sphi 0, %s90
      %s105 = sphi 0, %s91
      %s111 = sphi 0, %s113
      %s114 = sphi 0, %s111
      %s115 = sphi 0, %s114
      %s131 = sphi 0, %s115
      %s137 = sphi 0, %s139
      %s140 = sphi 0, %s137
      %s141 = sphi 0, %s140
      %s157 = sphi 0, %s141
    $region4: #{_byol_forward.1} parent=1 // loop_header_branch
      %20 = sbr.rel (%p18) target = $region8
    $region5: #{_byol_forward.1} parent=1 // loop_body
      %s22 = ssub.s32 %s17, 1
      %s23 = ssub.s32 %s17, 2
      %s24 = sadd.s32 %s17, 1
      %s26 = sadd.s32 %s25, 1
      %p29 = scmp.eq.s32.totalorder %s17, 1
      %p30 = scmp.ne.s32.totalorder %s25, %s27
      %p31 = scmp.eq.s32.totalorder %s17, 0
      %p32 = por %p30, %p31
      %p33 = scmp.ne.s32.totalorder %s25, %s27
      %p34 = scmp.eq.s32.totalorder %s22, 1
      %p35 = por %p33, %p34
      %p36 = scmp.ne.s32.totalorder %s27, %s28
      %p37 = scmp.eq.s32.totalorder %s22, 0
      %p38 = por %p36, %p37
      %p39 = scmp.ne.s32.totalorder %s27, %s28
      %p40 = scmp.eq.s32.totalorder %s23, 1
      %p41 = por %p39, %p40
      %p43 = scmp.ne.s32.totalorder %s28, %s42
      %p44 = scmp.eq.s32.totalorder %s23, 0
      %p45 = por %p43, %p44
      %s47 = sadd.s32 %s46, 1
      %p50 = scmp.eq.s32.totalorder %s17, 1
      %p51 = scmp.ne.s32.totalorder %s46, %s48
      %p52 = scmp.eq.s32.totalorder %s17, 0
      %p53 = por %p51, %p52
      %p54 = scmp.ne.s32.totalorder %s46, %s48
      %p55 = scmp.eq.s32.totalorder %s22, 1
      %p56 = por %p54, %p55
      %p57 = scmp.ne.s32.totalorder %s48, %s49
      %p58 = scmp.eq.s32.totalorder %s22, 0
      %p59 = por %p57, %p58
      %p60 = scmp.ne.s32.totalorder %s48, %s49
      %p61 = scmp.eq.s32.totalorder %s23, 1
      %p62 = por %p60, %p61
      %p64 = scmp.ne.s32.totalorder %s49, %s63
      %p65 = scmp.eq.s32.totalorder %s23, 0
      %p66 = por %p64, %p65
      %s68 = sadd.s32 %s67, 1
      %p71 = scmp.eq.s32.totalorder %s17, 1
      %p72 = scmp.ne.s32.totalorder %s67, %s69
      %p73 = scmp.eq.s32.totalorder %s17, 0
      %p74 = por %p72, %p73
      %p75 = scmp.ne.s32.totalorder %s67, %s69
      %p76 = scmp.eq.s32.totalorder %s22, 1
      %p77 = por %p75, %p76
      %p78 = scmp.ne.s32.totalorder %s69, %s70
      %p79 = scmp.eq.s32.totalorder %s22, 0
      %p80 = por %p78, %p79
      %p81 = scmp.ne.s32.totalorder %s69, %s70
      %p82 = scmp.eq.s32.totalorder %s23, 1
      %p83 = por %p81, %p82
      %p85 = scmp.ne.s32.totalorder %s70, %s84
      %p86 = scmp.eq.s32.totalorder %s23, 0
      %p87 = por %p85, %p86
      %s89 = sadd.s32 %s88, 1
      %p92 = scmp.eq.s32.totalorder %s17, 1
      %p93 = scmp.ne.s32.totalorder %s88, %s90
      %p94 = scmp.eq.s32.totalorder %s17, 0
      %p95 = por %p93, %p94
      %p96 = scmp.ne.s32.totalorder %s88, %s90
      %p97 = scmp.eq.s32.totalorder %s22, 1
      %p98 = por %p96, %p97
      %p99 = scmp.ne.s32.totalorder %s90, %s91
      %p100 = scmp.eq.s32.totalorder %s22, 0
      %p101 = por %p99, %p100
      %p102 = scmp.ne.s32.totalorder %s90, %s91
      %p103 = scmp.eq.s32.totalorder %s23, 1
      %p104 = por %p102, %p103
      %p106 = scmp.ne.s32.totalorder %s91, %s105
      %p107 = scmp.eq.s32.totalorder %s23, 0
      %p108 = por %p106, %p107
      %s109 = ssub.s32 %s17, %s24
      %p110 = scmp.eq.s32.totalorder %s109, 0
      %s112 = sadd.s32 %s111, 1
      %s113 = scalar_select %p110, %s111, %s112
      %p116 = pneg %p110
      %p117 = scmp.eq.s32.totalorder %s17, 1
      %p118 = por %p116, %p117
      %p119 = scmp.ne.s32.totalorder %s111, %s114
      %p120 = scmp.eq.s32.totalorder %s17, 0
      %p121 = por %p119, %p120
      %p122 = scmp.ne.s32.totalorder %s111, %s114
      %p123 = scmp.eq.s32.totalorder %s22, 1
      %p124 = por %p122, %p123
      %p125 = scmp.ne.s32.totalorder %s114, %s115
      %p126 = scmp.eq.s32.totalorder %s22, 0
      %p127 = por %p125, %p126
      %p128 = scmp.ne.s32.totalorder %s114, %s115
      %p129 = scmp.eq.s32.totalorder %s23, 1
      %p130 = por %p128, %p129
      %p132 = scmp.ne.s32.totalorder %s115, %s131
      %p133 = scmp.eq.s32.totalorder %s23, 0
      %p134 = por %p132, %p133
      %s135 = ssub.s32 %s17, %s24
      %p136 = scmp.eq.s32.totalorder %s135, 0
      %s138 = sadd.s32 %s137, 1
      %s139 = scalar_select %p136, %s137, %s138
      %p142 = pneg %p136
      %p143 = scmp.eq.s32.totalorder %s17, 1
      %p144 = por %p142, %p143
      %p145 = scmp.ne.s32.totalorder %s137, %s140
      %p146 = scmp.eq.s32.totalorder %s17, 0
      %p147 = por %p145, %p146
      %p148 = scmp.ne.s32.totalorder %s137, %s140
      %p149 = scmp.eq.s32.totalorder %s22, 1
      %p150 = por %p148, %p149
      %p151 = scmp.ne.s32.totalorder %s140, %s141
      %p152 = scmp.eq.s32.totalorder %s22, 0
      %p153 = por %p151, %p152
      %p154 = scmp.ne.s32.totalorder %s140, %s141
      %p155 = scmp.eq.s32.totalorder %s23, 1
      %p156 = por %p154, %p155
      %p158 = scmp.ne.s32.totalorder %s141, %s157
      %p159 = scmp.eq.s32.totalorder %s23, 0
      %p160 = por %p158, %p159
      %p161 = scmp.le.s32.totalorder 1, %s17
      %p162 = scmp.lt.s32.totalorder %s17, 3
      %p163 = pnand %p161, %p162
      %p164 = pneg %p163
      // Predicated region
      $region9: #{_byol_forward.1} parent=5 // pred_check
        _
      $region10: #{_byol_forward.1} parent=5 // pred_check_branch
        %166 = sbr.rel (%p163) target = $region12
      $region11: #{_byol_forward.1} parent=5 // pred_region
        %s167 = ssub.s32 %s17, 1
        // Predicated region
        $region13: #{_byol_forward.1} parent=11 // pred_check
          %p168 = pneg %p38
        $region14: #{_byol_forward.1} parent=11 // pred_check_branch
          %170 = sbr.rel (%p168) target = $region16
        $region15: #{_byol_forward.1} parent=11 // pred_region
          _
        $region16: #{_byol_forward.1} parent=11 // pred_fallthru
          _
        // Predicated region
        $region17: #{_byol_forward.1} parent=11 // pred_check
          %p171 = pneg %p59
        $region18: #{_byol_forward.1} parent=11 // pred_check_branch
          %173 = sbr.rel (%p171) target = $region20
        $region19: #{_byol_forward.1} parent=11 // pred_region
          %175 = vsyncadd [#allocation3], 0
          %s176 = sshll.u32 %s1, 4
          %s177 = int_to_ptr.hbm [resolvable:$true] %s176
          %s178 = sshll.u32 [#allocation2], 4
          %s179 = int_to_ptr.vmem [resolvable:$true] %s178
          %184 = dma.hbm_to_vmem [thread:$0]  %s177, 8960, %s179, [#allocation3], 128, 128, 8
        $region20: #{_byol_forward.1} parent=11 // pred_fallthru
          _
        // Predicated region
        $region21: #{_byol_forward.1} parent=11 // pred_check
          %p185 = pneg %p80
        $region22: #{_byol_forward.1} parent=11 // pred_check_branch
          %187 = sbr.rel (%p185) target = $region24
        $region23: #{_byol_forward.1} parent=11 // pred_region
          %189 = vsyncadd [#allocation6], 0
          %s190 = sshll.u32 %s2, 4
          %s191 = int_to_ptr.hbm [resolvable:$true] %s190
          %s192 = sshll.u32 [#allocation5], 4
          %s193 = int_to_ptr.vmem [resolvable:$true] %s192
          %198 = dma.hbm_to_vmem [thread:$0]  %s191, 8960, %s193, [#allocation6], 128, 128, 8
        $region24: #{_byol_forward.1} parent=11 // pred_fallthru
          _
        // Predicated region
        $region25: #{_byol_forward.1} parent=11 // pred_check
          %p199 = pneg %p101
        $region26: #{_byol_forward.1} parent=11 // pred_check_branch
          %201 = sbr.rel (%p199) target = $region28
        $region27: #{_byol_forward.1} parent=11 // pred_region
          _
        $region28: #{_byol_forward.1} parent=11 // pred_fallthru
          _
      $region12: #{_byol_forward.1} parent=5 // pred_fallthru
        _
      %p202 = scmp.lt.s32.totalorder %s17, 2
      // Predicated region
      $region29: #{_byol_forward.1} parent=5 // pred_check
        %p203 = pneg %p202
      $region30: #{_byol_forward.1} parent=5 // pred_check_branch
        %205 = sbr.rel (%p203) target = $region32
      $region31: #{_byol_forward.1} parent=5 // pred_region
        _
      $region32: #{_byol_forward.1} parent=5 // pred_fallthru
        _
      %p206 = scmp.le.s32.totalorder 1, %s17
      %p207 = scmp.lt.s32.totalorder %s17, 3
      %p208 = pnand %p206, %p207
      %p209 = pneg %p208
      // Predicated region
      $region33: #{_byol_forward.1} parent=5 // pred_check
        _
      $region34: #{_byol_forward.1} parent=5 // pred_check_branch
        %211 = sbr.rel (%p208) target = $region36
      $region35: #{_byol_forward.1} parent=5 // pred_region
        %s212 = ssub.s32 %s17, 1
        // Predicated region
        $region37: #{_byol_forward.1} parent=35 // pred_check
          %p213 = pneg %p59
        $region38: #{_byol_forward.1} parent=35 // pred_check_branch
          %215 = sbr.rel (%p213) target = $region40
        $region39: #{_byol_forward.1} parent=35 // pred_region
          %217 = dma.done [#allocation3], 8960
        $region40: #{_byol_forward.1} parent=35 // pred_fallthru
          _
        // Predicated region
        $region41: #{_byol_forward.1} parent=35 // pred_check
          %p218 = pneg %p80
        $region42: #{_byol_forward.1} parent=35 // pred_check_branch
          %220 = sbr.rel (%p218) target = $region44
        $region43: #{_byol_forward.1} parent=35 // pred_region
          %222 = dma.done [#allocation6], 8960
        $region44: #{_byol_forward.1} parent=35 // pred_fallthru
          _
        %p223 = pneg %p38
        %p224 = pneg %p35
        %p225 = pneg %p59
        %p226 = pneg %p56
        %p227 = pneg %p80
        %p228 = pneg %p77
        %p229 = pneg %p101
        %p230 = pneg %p98
        %p231 = pneg %p127
        %p232 = pneg %p124
        %s233 = sand.u32 %s114, 1
        %s234 = scalar_lea.sflag [#allocation4], %s233
        %s235 = sand.u32 %s114, 1
        %s236 = smul.addr %s235, 280
        %s237 = scalar_lea.vmem [#allocation7], %s236
        %p238 = pneg %p153
        %p239 = pneg %p150
        %p240 = scmp.lt.s32.totalorder %s22, 1
        %s241 = scalar_select %p240, %s22, 1
        %s242 = smul.addr %s241, 2
        %s243 = smul.addr %s242, 8
        %s244 = scalar_lea.vmem %s5, %s243
        %s245 = smul.u32 35, %s22
        %p246 = scmp.lt.s32.totalorder %s22, 1
        %s247 = scalar_select %p246, %s22, 1
        %s248 = smul.addr %s247, 2
        %s249 = smul.addr %s248, 8
        %s250 = scalar_lea.vmem %s5, %s249
        %p251 = scmp.eq.s32.totalorder %s22, 0
        // Predicated region
        $region45: #{_byol_forward.1} parent=35 // pred_check
          %p252 = pneg %p251
        $region46: #{_byol_forward.1} parent=35 // pred_check_branch
          %254 = sbr.rel (%p252) target = $region48
        $region47: #{_byol_forward.1} parent=35 // pred_region
          %v255 = vld [vmem:[#allocation2] sm:$0xff]
          %v256 = vld [vmem:[#allocation2 + $0x8] sm:$0xff]
          %v257 = vld [vmem:[#allocation2 + $0x10] sm:$0xff]
          %v258 = vld [vmem:[#allocation2 + $0x18] sm:$0xff]
          %v259 = vld [vmem:[#allocation2 + $0x20] sm:$0xff]
          %v260 = vld [vmem:[#allocation2 + $0x28] sm:$0xff]
          %v261 = vld [vmem:[#allocation2 + $0x30] sm:$0xff]
          %v262 = vld [vmem:[#allocation2 + $0x38] sm:$0xff]
          %v263 = vld [vmem:[#allocation2 + $0x40] sm:$0xff]
          %v264 = vld [vmem:[#allocation2 + $0x48] sm:$0xff]
          %v265 = vld [vmem:[#allocation2 + $0x50] sm:$0xff]
          %v266 = vld [vmem:[#allocation2 + $0x58] sm:$0xff]
          %v267 = vld [vmem:[#allocation2 + $0x60] sm:$0xff]
          %v268 = vld [vmem:[#allocation2 + $0x68] sm:$0xff]
          %v269 = vld [vmem:[#allocation2 + $0x70] sm:$0xff]
          %v270 = vld [vmem:[#allocation2 + $0x78] sm:$0xff]
          %v271 = vld [vmem:[#allocation2 + $0x80] sm:$0xff]
          %v272 = vld [vmem:[#allocation2 + $0x88] sm:$0xff]
          %v273 = vld [vmem:[#allocation2 + $0x90] sm:$0xff]
          %v274 = vld [vmem:[#allocation2 + $0x98] sm:$0xff]
          %v275 = vld [vmem:[#allocation2 + $0xa0] sm:$0xff]
          %v276 = vld [vmem:[#allocation2 + $0xa8] sm:$0xff]
          %v277 = vld [vmem:[#allocation2 + $0xb0] sm:$0xff]
          %v278 = vld [vmem:[#allocation2 + $0xb8] sm:$0xff]
          %v279 = vld [vmem:[#allocation2 + $0xc0] sm:$0xff]
          %v280 = vld [vmem:[#allocation2 + $0xc8] sm:$0xff]
          %v281 = vld [vmem:[#allocation2 + $0xd0] sm:$0xff]
          %v282 = vld [vmem:[#allocation2 + $0xd8] sm:$0xff]
          %v283 = vld [vmem:[#allocation2 + $0xe0] sm:$0xff]
          %v284 = vld [vmem:[#allocation2 + $0xe8] sm:$0xff]
          %v285 = vld [vmem:[#allocation2 + $0xf0] sm:$0xff]
          %v286 = vld [vmem:[#allocation2 + $0xf8] sm:$0xff]
          %v287 = vld [vmem:[#allocation2 + $0x100] sm:$0xff]
          %v288 = vld [vmem:[#allocation2 + $0x108] sm:$0xff]
          %v289 = vld [vmem:[#allocation2 + $0x110] sm:$0xff]
          %v290 = vmul.f32 %v255, 0.998001
          %v291 = vmul.f32 %v256, 0.998001
          %v292 = vmul.f32 %v257, 0.998001
          %v293 = vmul.f32 %v258, 0.998001
          %v294 = vmul.f32 %v259, 0.998001
          %v295 = vmul.f32 %v260, 0.998001
          %v296 = vmul.f32 %v261, 0.998001
          %v297 = vmul.f32 %v262, 0.998001
          %v298 = vmul.f32 %v263, 0.998001
          %v299 = vmul.f32 %v264, 0.998001
          %v300 = vmul.f32 %v265, 0.998001
          %v301 = vmul.f32 %v266, 0.998001
          %v302 = vmul.f32 %v267, 0.998001
          %v303 = vmul.f32 %v268, 0.998001
          %v304 = vmul.f32 %v269, 0.998001
          %v305 = vmul.f32 %v270, 0.998001
          %v306 = vmul.f32 %v271, 0.998001
          %v307 = vmul.f32 %v272, 0.998001
          %v308 = vmul.f32 %v273, 0.998001
          %v309 = vmul.f32 %v274, 0.998001
          %v310 = vmul.f32 %v275, 0.998001
          %v311 = vmul.f32 %v276, 0.998001
          %v312 = vmul.f32 %v277, 0.998001
          %v313 = vmul.f32 %v278, 0.998001
          %v314 = vmul.f32 %v279, 0.998001
          %v315 = vmul.f32 %v280, 0.998001
          %v316 = vmul.f32 %v281, 0.998001
          %v317 = vmul.f32 %v282, 0.998001
          %v318 = vmul.f32 %v283, 0.998001
          %v319 = vmul.f32 %v284, 0.998001
          %v320 = vmul.f32 %v285, 0.998001
          %v321 = vmul.f32 %v286, 0.998001
          %v322 = vmul.f32 %v287, 0.998001
          %v323 = vmul.f32 %v288, 0.998001
          %v324 = vmul.f32 %v289, 0.998001
          %v325 = vld [vmem:[#allocation5] sm:$0xff]
          %v326 = vld [vmem:[#allocation5 + $0x8] sm:$0xff]
          %v327 = vld [vmem:[#allocation5 + $0x10] sm:$0xff]
          %v328 = vld [vmem:[#allocation5 + $0x18] sm:$0xff]
          %v329 = vld [vmem:[#allocation5 + $0x20] sm:$0xff]
          %v330 = vld [vmem:[#allocation5 + $0x28] sm:$0xff]
          %v331 = vld [vmem:[#allocation5 + $0x30] sm:$0xff]
          %v332 = vld [vmem:[#allocation5 + $0x38] sm:$0xff]
          %v333 = vld [vmem:[#allocation5 + $0x40] sm:$0xff]
          %v334 = vld [vmem:[#allocation5 + $0x48] sm:$0xff]
          %v335 = vld [vmem:[#allocation5 + $0x50] sm:$0xff]
          %v336 = vld [vmem:[#allocation5 + $0x58] sm:$0xff]
          %v337 = vld [vmem:[#allocation5 + $0x60] sm:$0xff]
          %v338 = vld [vmem:[#allocation5 + $0x68] sm:$0xff]
          %v339 = vld [vmem:[#allocation5 + $0x70] sm:$0xff]
          %v340 = vld [vmem:[#allocation5 + $0x78] sm:$0xff]
          %v341 = vld [vmem:[#allocation5 + $0x80] sm:$0xff]
          %v342 = vld [vmem:[#allocation5 + $0x88] sm:$0xff]
          %v343 = vld [vmem:[#allocation5 + $0x90] sm:$0xff]
          %v344 = vld [vmem:[#allocation5 + $0x98] sm:$0xff]
          %v345 = vld [vmem:[#allocation5 + $0xa0] sm:$0xff]
          %v346 = vld [vmem:[#allocation5 + $0xa8] sm:$0xff]
          %v347 = vld [vmem:[#allocation5 + $0xb0] sm:$0xff]
          %v348 = vld [vmem:[#allocation5 + $0xb8] sm:$0xff]
          %v349 = vld [vmem:[#allocation5 + $0xc0] sm:$0xff]
          %v350 = vld [vmem:[#allocation5 + $0xc8] sm:$0xff]
          %v351 = vld [vmem:[#allocation5 + $0xd0] sm:$0xff]
          %v352 = vld [vmem:[#allocation5 + $0xd8] sm:$0xff]
          %v353 = vld [vmem:[#allocation5 + $0xe0] sm:$0xff]
          %v354 = vld [vmem:[#allocation5 + $0xe8] sm:$0xff]
          %v355 = vld [vmem:[#allocation5 + $0xf0] sm:$0xff]
          %v356 = vld [vmem:[#allocation5 + $0xf8] sm:$0xff]
          %v357 = vld [vmem:[#allocation5 + $0x100] sm:$0xff]
          %v358 = vld [vmem:[#allocation5 + $0x108] sm:$0xff]
          %v359 = vld [vmem:[#allocation5 + $0x110] sm:$0xff]
          %v360 = vmul.f32 %v325, 0.001999
          %v361 = vmul.f32 %v326, 0.001999
          %v362 = vmul.f32 %v327, 0.001999
          %v363 = vmul.f32 %v328, 0.001999
          %v364 = vmul.f32 %v329, 0.001999
          %v365 = vmul.f32 %v330, 0.001999
          %v366 = vmul.f32 %v331, 0.001999
          %v367 = vmul.f32 %v332, 0.001999
          %v368 = vmul.f32 %v333, 0.001999
          %v369 = vmul.f32 %v334, 0.001999
          %v370 = vmul.f32 %v335, 0.001999
          %v371 = vmul.f32 %v336, 0.001999
          %v372 = vmul.f32 %v337, 0.001999
          %v373 = vmul.f32 %v338, 0.001999
          %v374 = vmul.f32 %v339, 0.001999
          %v375 = vmul.f32 %v340, 0.001999
          %v376 = vmul.f32 %v341, 0.001999
          %v377 = vmul.f32 %v342, 0.001999
          %v378 = vmul.f32 %v343, 0.001999
          %v379 = vmul.f32 %v344, 0.001999
          %v380 = vmul.f32 %v345, 0.001999
          %v381 = vmul.f32 %v346, 0.001999
          %v382 = vmul.f32 %v347, 0.001999
          %v383 = vmul.f32 %v348, 0.001999
          %v384 = vmul.f32 %v349, 0.001999
          %v385 = vmul.f32 %v350, 0.001999
          %v386 = vmul.f32 %v351, 0.001999
          %v387 = vmul.f32 %v352, 0.001999
          %v388 = vmul.f32 %v353, 0.001999
          %v389 = vmul.f32 %v354, 0.001999
          %v390 = vmul.f32 %v355, 0.001999
          %v391 = vmul.f32 %v356, 0.001999
          %v392 = vmul.f32 %v357, 0.001999
          %v393 = vmul.f32 %v358, 0.001999
          %v394 = vmul.f32 %v359, 0.001999
          %v395 = vadd.f32 %v290, %v360
          %v396 = vadd.f32 %v291, %v361
          %v397 = vadd.f32 %v292, %v362
          %v398 = vadd.f32 %v293, %v363
          %v399 = vadd.f32 %v294, %v364
          %v400 = vadd.f32 %v295, %v365
          %v401 = vadd.f32 %v296, %v366
          %v402 = vadd.f32 %v297, %v367
          %v403 = vadd.f32 %v298, %v368
          %v404 = vadd.f32 %v299, %v369
          %v405 = vadd.f32 %v300, %v370
          %v406 = vadd.f32 %v301, %v371
          %v407 = vadd.f32 %v302, %v372
          %v408 = vadd.f32 %v303, %v373
          %v409 = vadd.f32 %v304, %v374
          %v410 = vadd.f32 %v305, %v375
          %v411 = vadd.f32 %v306, %v376
          %v412 = vadd.f32 %v307, %v377
          %v413 = vadd.f32 %v308, %v378
          %v414 = vadd.f32 %v309, %v379
          %v415 = vadd.f32 %v310, %v380
          %v416 = vadd.f32 %v311, %v381
          %v417 = vadd.f32 %v312, %v382
          %v418 = vadd.f32 %v313, %v383
          %v419 = vadd.f32 %v314, %v384
          %v420 = vadd.f32 %v315, %v385
          %v421 = vadd.f32 %v316, %v386
          %v422 = vadd.f32 %v317, %v387
          %v423 = vadd.f32 %v318, %v388
          %v424 = vadd.f32 %v319, %v389
          %v425 = vadd.f32 %v320, %v390
          %v426 = vadd.f32 %v321, %v391
          %v427 = vadd.f32 %v322, %v392
          %v428 = vadd.f32 %v323, %v393
          %v429 = vadd.f32 %v324, %v394
          %430 = vst [vmem:[%s237] sm:$0xff] %v395
          %431 = vst [vmem:[%s237 + $0x8] sm:$0xff] %v396
          %432 = vst [vmem:[%s237 + $0x10] sm:$0xff] %v397
          %433 = vst [vmem:[%s237 + $0x18] sm:$0xff] %v398
          %434 = vst [vmem:[%s237 + $0x20] sm:$0xff] %v399
          %435 = vst [vmem:[%s237 + $0x28] sm:$0xff] %v400
          %436 = vst [vmem:[%s237 + $0x30] sm:$0xff] %v401
          %437 = vst [vmem:[%s237 + $0x38] sm:$0xff] %v402
          %438 = vst [vmem:[%s237 + $0x40] sm:$0xff] %v403
          %439 = vst [vmem:[%s237 + $0x48] sm:$0xff] %v404
          %440 = vst [vmem:[%s237 + $0x50] sm:$0xff] %v405
          %441 = vst [vmem:[%s237 + $0x58] sm:$0xff] %v406
          %442 = vst [vmem:[%s237 + $0x60] sm:$0xff] %v407
          %443 = vst [vmem:[%s237 + $0x68] sm:$0xff] %v408
          %444 = vst [vmem:[%s237 + $0x70] sm:$0xff] %v409
          %445 = vst [vmem:[%s237 + $0x78] sm:$0xff] %v410
          %446 = vst [vmem:[%s237 + $0x80] sm:$0xff] %v411
          %447 = vst [vmem:[%s237 + $0x88] sm:$0xff] %v412
          %448 = vst [vmem:[%s237 + $0x90] sm:$0xff] %v413
          %449 = vst [vmem:[%s237 + $0x98] sm:$0xff] %v414
          %450 = vst [vmem:[%s237 + $0xa0] sm:$0xff] %v415
          %451 = vst [vmem:[%s237 + $0xa8] sm:$0xff] %v416
          %452 = vst [vmem:[%s237 + $0xb0] sm:$0xff] %v417
          %453 = vst [vmem:[%s237 + $0xb8] sm:$0xff] %v418
          %454 = vst [vmem:[%s237 + $0xc0] sm:$0xff] %v419
          %455 = vst [vmem:[%s237 + $0xc8] sm:$0xff] %v420
          %456 = vst [vmem:[%s237 + $0xd0] sm:$0xff] %v421
          %457 = vst [vmem:[%s237 + $0xd8] sm:$0xff] %v422
          %458 = vst [vmem:[%s237 + $0xe0] sm:$0xff] %v423
          %459 = vst [vmem:[%s237 + $0xe8] sm:$0xff] %v424
          %460 = vst [vmem:[%s237 + $0xf0] sm:$0xff] %v425
          %461 = vst [vmem:[%s237 + $0xf8] sm:$0xff] %v426
          %462 = vst [vmem:[%s237 + $0x100] sm:$0xff] %v427
          %463 = vst [vmem:[%s237 + $0x108] sm:$0xff] %v428
          %464 = vst [vmem:[%s237 + $0x110] sm:$0xff] %v429
          %v465 = vld [vmem:[%s0] sm:$0xff]
          %v466 = vld [vmem:[%s0 + $0x8] sm:$0xff]
          %v467 = vld [vmem:[%s0 + $0x10] sm:$0xff]
          %v468 = vld [vmem:[%s0 + $0x18] sm:$0xff]
          %v469 = vld [vmem:[#allocation5] sm:$0xff]
          %v470 = vld [vmem:[#allocation5 + $0x8] sm:$0xff]
          %v471 = vld [vmem:[#allocation5 + $0x10] sm:$0xff]
          %v472 = vld [vmem:[#allocation5 + $0x18] sm:$0xff]
          %v473 = vld [vmem:[#allocation5 + $0x20] sm:$0xff]
          %v474 = vld [vmem:[#allocation5 + $0x28] sm:$0xff]
          %v475 = vld [vmem:[#allocation5 + $0x30] sm:$0xff]
          %v476 = vld [vmem:[#allocation5 + $0x38] sm:$0xff]
          %v477 = vld [vmem:[#allocation5 + $0x40] sm:$0xff]
          %v478 = vld [vmem:[#allocation5 + $0x48] sm:$0xff]
          %v479 = vld [vmem:[#allocation5 + $0x50] sm:$0xff]
          %v480 = vld [vmem:[#allocation5 + $0x58] sm:$0xff]
          %v481 = vld [vmem:[#allocation5 + $0x60] sm:$0xff]
          %v482 = vld [vmem:[#allocation5 + $0x68] sm:$0xff]
          %v483 = vld [vmem:[#allocation5 + $0x70] sm:$0xff]
          %v484 = vld [vmem:[#allocation5 + $0x78] sm:$0xff]
          %v485 = vld [vmem:[#allocation5 + $0x80] sm:$0xff]
          %v486 = vld [vmem:[#allocation5 + $0x88] sm:$0xff]
          %v487 = vld [vmem:[#allocation5 + $0x90] sm:$0xff]
          %v488 = vld [vmem:[#allocation5 + $0x98] sm:$0xff]
          %v489 = vld [vmem:[#allocation5 + $0xa0] sm:$0xff]
          %v490 = vld [vmem:[#allocation5 + $0xa8] sm:$0xff]
          %v491 = vld [vmem:[#allocation5 + $0xb0] sm:$0xff]
          %v492 = vld [vmem:[#allocation5 + $0xb8] sm:$0xff]
          %v493 = vld [vmem:[#allocation5 + $0xc0] sm:$0xff]
          %v494 = vld [vmem:[#allocation5 + $0xc8] sm:$0xff]
          %v495 = vld [vmem:[#allocation5 + $0xd0] sm:$0xff]
          %v496 = vld [vmem:[#allocation5 + $0xd8] sm:$0xff]
          %v497 = vld [vmem:[#allocation5 + $0xe0] sm:$0xff]
          %v498 = vld [vmem:[#allocation5 + $0xe8] sm:$0xff]
          %v499 = vld [vmem:[#allocation5 + $0xf0] sm:$0xff]
          %v500 = vld [vmem:[#allocation5 + $0xf8] sm:$0xff]
          %v501 = vpack.c.bf16 %v467, %v465
          %v502 = vpack.c.bf16 %v468, %v466
          %v503 = vpack.c.bf16 %v470, %v469
          %v504 = vpack.c.bf16 %v472, %v471
          %v505 = vpack.c.bf16 %v474, %v473
          %v506 = vpack.c.bf16 %v476, %v475
          %v507 = vpack.c.bf16 %v478, %v477
          %v508 = vpack.c.bf16 %v480, %v479
          %v509 = vpack.c.bf16 %v482, %v481
          %v510 = vpack.c.bf16 %v484, %v483
          %v511 = vpack.c.bf16 %v486, %v485
          %v512 = vpack.c.bf16 %v488, %v487
          %v513 = vpack.c.bf16 %v490, %v489
          %v514 = vpack.c.bf16 %v492, %v491
          %v515 = vpack.c.bf16 %v494, %v493
          %v516 = vpack.c.bf16 %v496, %v495
          %v517 = vpack.c.bf16 %v498, %v497
          %v518 = vpack.c.bf16 %v500, %v499
          %v519 = vld [vmem:[#allocation5 + $0x100] sm:$0x1]
          %v520 = vperm.slane %v519, 0
          %521 = vmatpush.bf16.msra.mxu0 %v510
          %522 = vmatpush.bf16.msra.mxu0 %v509
          %523 = vmatpush.bf16.msra.mxu0 %v508
          %524 = vmatpush.bf16.msra.mxu0 %v507
          %525 = vmatpush.bf16.msra.mxu0 %v506
          %526 = vmatpush.bf16.msra.mxu0 %v505
          %527 = vmatpush.bf16.msra.mxu0 %v504
          %528 = vmatpush.bf16.msra.mxu0 %v503
          %529 = vmatmul.bf16.gmra.mxu0 %v501
          %v530 = vpop.f32.mrf.mxu0
          %v531 = vadd.f32 %v520, %v530
          %v532 = vpop.f32.mrf.mxu0
          %v533 = vadd.f32 %v520, %v532
          %534 = vdwg.mxu0
          %535 = vmatpush.bf16.msra.mxu0 %v518
          %536 = vmatpush.bf16.msra.mxu0 %v517
          %537 = vmatpush.bf16.msra.mxu0 %v516
          %538 = vmatpush.bf16.msra.mxu0 %v515
          %539 = vmatpush.bf16.msra.mxu0 %v514
          %540 = vmatpush.bf16.msra.mxu0 %v513
          %541 = vmatpush.bf16.msra.mxu0 %v512
          %542 = vmatpush.bf16.msra.mxu0 %v511
          %543 = vmatmul.bf16.gmra.mxu0 %v502
          %v544 = vpop.f32.mrf.mxu0
          %v545 = vadd.f32 %v531, %v544
          %v546 = vpop.f32.mrf.mxu0
          %v547 = vadd.f32 %v533, %v546
          %548 = vdwg.mxu0
          %v549 = vld [vmem:[#allocation5 + $0x108] sm:$0xff]
          %v550 = vld [vmem:[#allocation5 + $0x110] sm:$0xff]
          %v551 = vld [vmem:[#allocation5 + $0x118] sm:$0xff]
          %v552 = vld [vmem:[#allocation5 + $0x120] sm:$0xff]
          %v553 = vld [vmem:[#allocation5 + $0x128] sm:$0xff]
          %v554 = vld [vmem:[#allocation5 + $0x130] sm:$0xff]
          %v555 = vld [vmem:[#allocation5 + $0x138] sm:$0xff]
          %v556 = vld [vmem:[#allocation5 + $0x140] sm:$0xff]
          %v557 = vld [vmem:[#allocation5 + $0x148] sm:$0xff]
          %v558 = vld [vmem:[#allocation5 + $0x150] sm:$0xff]
          %v559 = vld [vmem:[#allocation5 + $0x158] sm:$0xff]
          %v560 = vld [vmem:[#allocation5 + $0x160] sm:$0xff]
          %v561 = vld [vmem:[#allocation5 + $0x168] sm:$0xff]
          %v562 = vld [vmem:[#allocation5 + $0x170] sm:$0xff]
          %v563 = vld [vmem:[#allocation5 + $0x178] sm:$0xff]
          %v564 = vld [vmem:[#allocation5 + $0x180] sm:$0xff]
          %v565 = vld [vmem:[#allocation5 + $0x188] sm:$0x1]
          %v566 = vld [vmem:[#allocation5 + $0x190] sm:$0x1]
          %v567 = vld [vmem:[#allocation5 + $0x198] sm:$0x1]
          %v568 = vld [vmem:[#allocation5 + $0x1a0] sm:$0xff]
          %v569 = vld [vmem:[#allocation5 + $0x1a8] sm:$0xff]
          %v570 = vld [vmem:[#allocation5 + $0x1b0] sm:$0xff]
          %v571 = vld [vmem:[#allocation5 + $0x1b8] sm:$0xff]
          %v572 = vld [vmem:[#allocation5 + $0x1c0] sm:$0xff]
          %v573 = vld [vmem:[#allocation5 + $0x1c8] sm:$0xff]
          %v574 = vld [vmem:[#allocation5 + $0x1d0] sm:$0xff]
          %v575 = vld [vmem:[#allocation5 + $0x1d8] sm:$0xff]
          %v576 = vld [vmem:[#allocation5 + $0x1e0] sm:$0xff]
          %v577 = vld [vmem:[#allocation5 + $0x1e8] sm:$0xff]
          %v578 = vld [vmem:[#allocation5 + $0x1f0] sm:$0xff]
          %v579 = vld [vmem:[#allocation5 + $0x1f8] sm:$0xff]
          %v580 = vld [vmem:[#allocation5 + $0x200] sm:$0xff]
          %v581 = vld [vmem:[#allocation5 + $0x208] sm:$0xff]
          %v582 = vld [vmem:[#allocation5 + $0x210] sm:$0xff]
          %v583 = vld [vmem:[#allocation5 + $0x218] sm:$0xff]
          %v584 = vld [vmem:[#allocation5 + $0x220] sm:$0x1]
          %v585 = vpack.c.bf16 %v547, %v545
          %v586 = vpack.c.bf16 %v550, %v549
          %v587 = vpack.c.bf16 %v552, %v551
          %v588 = vpack.c.bf16 %v554, %v553
          %v589 = vpack.c.bf16 %v556, %v555
          %v590 = vpack.c.bf16 %v558, %v557
          %v591 = vpack.c.bf16 %v560, %v559
          %v592 = vpack.c.bf16 %v562, %v561
          %v593 = vpack.c.bf16 %v564, %v563
          %v594 = vperm.slane %v565, 0
          %595 = vmatpush.bf16.msra.mxu0 %v593
          %596 = vmatpush.bf16.msra.mxu0 %v592
          %597 = vmatpush.bf16.msra.mxu0 %v591
          %598 = vmatpush.bf16.msra.mxu0 %v590
          %599 = vmatpush.bf16.msra.mxu0 %v589
          %600 = vmatpush.bf16.msra.mxu0 %v588
          %601 = vmatpush.bf16.msra.mxu0 %v587
          %602 = vmatpush.bf16.msra.mxu0 %v586
          %603 = vmatmul.bf16.gmra.mxu0 %v585
          %v604 = vpop.f32.mrf.mxu0
          %v605 = vadd.f32 %v594, %v604
          %v606 = vpop.f32.mrf.mxu0
          %v607 = vadd.f32 %v594, %v606
          %608 = vdwg.mxu0
          %v609 = vrot.slane %v605, 4
          %v610 = vadd.f32 %v605, %v609
          %v611 = vrot.slane %v610, 2
          %v612 = vadd.f32 %v610, %v611
          %v613 = vrot.slane %v612, 1
          %v614 = vadd.f32 %v612, %v613
          %v615 = vrcp.pop 8.0
          %v616 = vmul.f32 8.0, %v615
          %v617 = vsub.f32 1.0, %v616
          %v618 = vmul.f32 %v615, %v617
          %v619 = vadd.f32 %v615, %v618
          %vm620 = vweird.f32 %v615
          %v621 = vsel %vm620, %v615, %v619
          %v622 = vmul.f32 %v614, %v621
          %v623 = vmul.f32 %v605, %v605
          %v624 = vrot.slane %v623, 4
          %v625 = vadd.f32 %v623, %v624
          %v626 = vrot.slane %v625, 2
          %v627 = vadd.f32 %v625, %v626
          %v628 = vrot.slane %v627, 1
          %v629 = vadd.f32 %v627, %v628
          %v630 = vmul.f32 %v629, %v621
          %v631 = vmul.f32 %v622, %v622
          %v632 = vsub.f32 %v630, %v631
          %v633 = vsub.f32 %v605, %v622
          %v634 = vadd.f32 %v632, 1e-05
          %v635 = vrsqrt.pop %v634
          %v636 = vmul.f32 %v635, %v634
          %v637 = vmul.f32 %v636, %v635
          %v638 = vmul.f32 0.5, %v637
          %v639 = vsub.f32 1.5, %v638
          %v640 = vmul.f32 %v635, %v639
          %vm641 = vweird.f32 %v634
          %vm642 = vweird.f32 %v635
          %vm643 = vmor %vm641, %vm642
          %v644 = vsel %vm643, %v635, %v640
          %v645 = vmul.f32 %v633, %v644
          %v646 = vperm.slane %v566, 0
          %v647 = vmul.f32 %v646, %v645
          %v648 = vperm.slane %v567, 0
          %v649 = vadd.f32 %v647, %v648
          %v650 = vmax.f32 %v649, 0.0
          %v651 = vrot.slane %v607, 4
          %v652 = vadd.f32 %v607, %v651
          %v653 = vrot.slane %v652, 2
          %v654 = vadd.f32 %v652, %v653
          %v655 = vrot.slane %v654, 1
          %v656 = vadd.f32 %v654, %v655
          %v657 = vmul.f32 %v656, %v621
          %v658 = vmul.f32 %v607, %v607
          %v659 = vrot.slane %v658, 4
          %v660 = vadd.f32 %v658, %v659
          %v661 = vrot.slane %v660, 2
          %v662 = vadd.f32 %v660, %v661
          %v663 = vrot.slane %v662, 1
          %v664 = vadd.f32 %v662, %v663
          %v665 = vmul.f32 %v664, %v621
          %v666 = vmul.f32 %v657, %v657
          %v667 = vsub.f32 %v665, %v666
          %v668 = vsub.f32 %v607, %v657
          %v669 = vadd.f32 %v667, 1e-05
          %v670 = vrsqrt.pop %v669
          %v671 = vmul.f32 %v670, %v669
          %v672 = vmul.f32 %v671, %v670
          %v673 = vmul.f32 0.5, %v672
          %v674 = vsub.f32 1.5, %v673
          %v675 = vmul.f32 %v670, %v674
          %vm676 = vweird.f32 %v669
          %vm677 = vweird.f32 %v670
          %vm678 = vmor %vm676, %vm677
          %v679 = vsel %vm678, %v670, %v675
          %v680 = vmul.f32 %v668, %v679
          %v681 = vmul.f32 %v646, %v680
          %v682 = vadd.f32 %v681, %v648
          %v683 = vmax.f32 %v682, 0.0
          %v684 = vpack.c.bf16 %v683, %v650
          %v685 = vpack.c.bf16 %v569, %v568
          %v686 = vpack.c.bf16 %v571, %v570
          %v687 = vpack.c.bf16 %v573, %v572
          %v688 = vpack.c.bf16 %v575, %v574
          %v689 = vpack.c.bf16 %v577, %v576
          %v690 = vpack.c.bf16 %v579, %v578
          %v691 = vpack.c.bf16 %v581, %v580
          %v692 = vpack.c.bf16 %v583, %v582
          %v693 = vperm.slane %v584, 0
          %694 = vmatpush.bf16.msra.mxu0 %v692
          %695 = vmatpush.bf16.msra.mxu0 %v691
          %696 = vmatpush.bf16.msra.mxu0 %v690
          %697 = vmatpush.bf16.msra.mxu0 %v689
          %698 = vmatpush.bf16.msra.mxu0 %v688
          %699 = vmatpush.bf16.msra.mxu0 %v687
          %700 = vmatpush.bf16.msra.mxu0 %v686
          %701 = vmatpush.bf16.msra.mxu0 %v685
          %702 = vmatmul.bf16.gmra.mxu0 %v684
          %v703 = vpop.f32.mrf.mxu0
          %v704 = vadd.f32 %v693, %v703
          %v705 = vpop.f32.mrf.mxu0
          %v706 = vadd.f32 %v693, %v705
          %707 = vdwg.mxu0
          %v708 = vld [vmem:[%s3] sm:$0xff]
          %v709 = vld [vmem:[%s3 + $0x8] sm:$0xff]
          %v710 = vld [vmem:[%s3 + $0x10] sm:$0xff]
          %v711 = vld [vmem:[%s3 + $0x18] sm:$0xff]
          %v712 = vld [vmem:[%s3 + $0x20] sm:$0xff]
          %v713 = vld [vmem:[%s3 + $0x28] sm:$0xff]
          %v714 = vld [vmem:[%s3 + $0x30] sm:$0xff]
          %v715 = vld [vmem:[%s3 + $0x38] sm:$0xff]
          %v716 = vld [vmem:[%s3 + $0x40] sm:$0xff]
          %v717 = vld [vmem:[%s3 + $0x48] sm:$0xff]
          %v718 = vld [vmem:[%s3 + $0x50] sm:$0xff]
          %v719 = vld [vmem:[%s3 + $0x58] sm:$0xff]
          %v720 = vld [vmem:[%s3 + $0x60] sm:$0xff]
          %v721 = vld [vmem:[%s3 + $0x68] sm:$0xff]
          %v722 = vld [vmem:[%s3 + $0x70] sm:$0xff]
          %v723 = vld [vmem:[%s3 + $0x78] sm:$0xff]
          %v724 = vld [vmem:[%s3 + $0x80] sm:$0x1]
          %v725 = vld [vmem:[%s3 + $0x88] sm:$0x1]
          %v726 = vld [vmem:[%s3 + $0x90] sm:$0x1]
          %v727 = vld [vmem:[%s3 + $0x98] sm:$0xff]
          %v728 = vld [vmem:[%s3 + $0xa0] sm:$0xff]
          %v729 = vld [vmem:[%s3 + $0xa8] sm:$0xff]
          %v730 = vld [vmem:[%s3 + $0xb0] sm:$0xff]
          %v731 = vld [vmem:[%s3 + $0xb8] sm:$0xff]
          %v732 = vld [vmem:[%s3 + $0xc0] sm:$0xff]
          %v733 = vld [vmem:[%s3 + $0xc8] sm:$0xff]
          %v734 = vld [vmem:[%s3 + $0xd0] sm:$0xff]
          %v735 = vld [vmem:[%s3 + $0xd8] sm:$0xff]
          %v736 = vld [vmem:[%s3 + $0xe0] sm:$0xff]
          %v737 = vld [vmem:[%s3 + $0xe8] sm:$0xff]
          %v738 = vld [vmem:[%s3 + $0xf0] sm:$0xff]
          %v739 = vld [vmem:[%s3 + $0xf8] sm:$0xff]
          %v740 = vld [vmem:[%s3 + $0x100] sm:$0xff]
          %v741 = vld [vmem:[%s3 + $0x108] sm:$0xff]
          %v742 = vld [vmem:[%s3 + $0x110] sm:$0xff]
          %v743 = vld [vmem:[%s3 + $0x118] sm:$0x1]
          %v744 = vpack.c.bf16 %v706, %v704
          %v745 = vpack.c.bf16 %v709, %v708
          %v746 = vpack.c.bf16 %v711, %v710
          %v747 = vpack.c.bf16 %v713, %v712
          %v748 = vpack.c.bf16 %v715, %v714
          %v749 = vpack.c.bf16 %v717, %v716
          %v750 = vpack.c.bf16 %v719, %v718
          %v751 = vpack.c.bf16 %v721, %v720
          %v752 = vpack.c.bf16 %v723, %v722
          %v753 = vperm.slane %v724, 0
          %754 = vmatpush.bf16.msra.mxu0 %v752
          %755 = vmatpush.bf16.msra.mxu0 %v751
          %756 = vmatpush.bf16.msra.mxu0 %v750
          %757 = vmatpush.bf16.msra.mxu0 %v749
          %758 = vmatpush.bf16.msra.mxu0 %v748
          %759 = vmatpush.bf16.msra.mxu0 %v747
          %760 = vmatpush.bf16.msra.mxu0 %v746
          %761 = vmatpush.bf16.msra.mxu0 %v745
          %762 = vmatmul.bf16.gmra.mxu0 %v744
          %v763 = vpop.f32.mrf.mxu0
          %v764 = vadd.f32 %v753, %v763
          %v765 = vpop.f32.mrf.mxu0
          %v766 = vadd.f32 %v753, %v765
          %767 = vdwg.mxu0
          %v768 = vrot.slane %v764, 4
          %v769 = vadd.f32 %v764, %v768
          %v770 = vrot.slane %v769, 2
          %v771 = vadd.f32 %v769, %v770
          %v772 = vrot.slane %v771, 1
          %v773 = vadd.f32 %v771, %v772
          %v774 = vmul.f32 %v773, %v621
          %v775 = vmul.f32 %v764, %v764
          %v776 = vrot.slane %v775, 4
          %v777 = vadd.f32 %v775, %v776
          %v778 = vrot.slane %v777, 2
          %v779 = vadd.f32 %v777, %v778
          %v780 = vrot.slane %v779, 1
          %v781 = vadd.f32 %v779, %v780
          %v782 = vmul.f32 %v781, %v621
          %v783 = vmul.f32 %v774, %v774
          %v784 = vsub.f32 %v782, %v783
          %v785 = vsub.f32 %v764, %v774
          %v786 = vadd.f32 %v784, 1e-05
          %v787 = vrsqrt.pop %v786
          %v788 = vmul.f32 %v787, %v786
          %v789 = vmul.f32 %v788, %v787
          %v790 = vmul.f32 0.5, %v789
          %v791 = vsub.f32 1.5, %v790
          %v792 = vmul.f32 %v787, %v791
          %vm793 = vweird.f32 %v786
          %vm794 = vweird.f32 %v787
          %vm795 = vmor %vm793, %vm794
          %v796 = vsel %vm795, %v787, %v792
          %v797 = vmul.f32 %v785, %v796
          %v798 = vperm.slane %v725, 0
          %v799 = vmul.f32 %v798, %v797
          %v800 = vperm.slane %v726, 0
          %v801 = vadd.f32 %v799, %v800
          %v802 = vmax.f32 %v801, 0.0
          %v803 = vrot.slane %v766, 4
          %v804 = vadd.f32 %v766, %v803
          %v805 = vrot.slane %v804, 2
          %v806 = vadd.f32 %v804, %v805
          %v807 = vrot.slane %v806, 1
          %v808 = vadd.f32 %v806, %v807
          %v809 = vmul.f32 %v808, %v621
          %v810 = vmul.f32 %v766, %v766
          %v811 = vrot.slane %v810, 4
          %v812 = vadd.f32 %v810, %v811
          %v813 = vrot.slane %v812, 2
          %v814 = vadd.f32 %v812, %v813
          %v815 = vrot.slane %v814, 1
          %v816 = vadd.f32 %v814, %v815
          %v817 = vmul.f32 %v816, %v621
          %v818 = vmul.f32 %v809, %v809
          %v819 = vsub.f32 %v817, %v818
          %v820 = vsub.f32 %v766, %v809
          %v821 = vadd.f32 %v819, 1e-05
          %v822 = vrsqrt.pop %v821
          %v823 = vmul.f32 %v822, %v821
          %v824 = vmul.f32 %v823, %v822
          %v825 = vmul.f32 0.5, %v824
          %v826 = vsub.f32 1.5, %v825
          %v827 = vmul.f32 %v822, %v826
          %vm828 = vweird.f32 %v821
          %vm829 = vweird.f32 %v822
          %vm830 = vmor %vm828, %vm829
          %v831 = vsel %vm830, %v822, %v827
          %v832 = vmul.f32 %v820, %v831
          %v833 = vmul.f32 %v798, %v832
          %v834 = vadd.f32 %v833, %v800
          %v835 = vmax.f32 %v834, 0.0
          %v836 = vpack.c.bf16 %v835, %v802
          %v837 = vpack.c.bf16 %v728, %v727
          %v838 = vpack.c.bf16 %v730, %v729
          %v839 = vpack.c.bf16 %v732, %v731
          %v840 = vpack.c.bf16 %v734, %v733
          %v841 = vpack.c.bf16 %v736, %v735
          %v842 = vpack.c.bf16 %v738, %v737
          %v843 = vpack.c.bf16 %v740, %v739
          %v844 = vpack.c.bf16 %v742, %v741
          %v845 = vperm.slane %v743, 0
          %846 = vmatpush.bf16.msra.mxu0 %v844
          %847 = vmatpush.bf16.msra.mxu0 %v843
          %848 = vmatpush.bf16.msra.mxu0 %v842
          %849 = vmatpush.bf16.msra.mxu0 %v841
          %850 = vmatpush.bf16.msra.mxu0 %v840
          %851 = vmatpush.bf16.msra.mxu0 %v839
          %852 = vmatpush.bf16.msra.mxu0 %v838
          %853 = vmatpush.bf16.msra.mxu0 %v837
          %854 = vmatmul.bf16.gmra.mxu0 %v836
          %v855 = vpop.f32.mrf.mxu0
          %v856 = vadd.f32 %v845, %v855
          %v857 = vpop.f32.mrf.mxu0
          %v858 = vadd.f32 %v845, %v857
          %859 = vdwg.mxu0
          %860 = vst [vmem:[%s250] sm:$0xff] %v856
          %861 = vst [vmem:[%s250 + $0x8] sm:$0xff] %v858
        $region48: #{_byol_forward.1} parent=35 // pred_fallthru
          _
        %p862 = scmp.eq.s32.totalorder %s22, 1
        // Predicated region
        $region49: #{_byol_forward.1} parent=35 // pred_check
          %p863 = pneg %p862
        $region50: #{_byol_forward.1} parent=35 // pred_check_branch
          %865 = sbr.rel (%p863) target = $region52
        $region51: #{_byol_forward.1} parent=35 // pred_region
          %v866 = vld [vmem:[#allocation2 + $0x118] sm:$0xff]
          %v867 = vld [vmem:[#allocation2 + $0x120] sm:$0xff]
          %v868 = vld [vmem:[#allocation2 + $0x128] sm:$0xff]
          %v869 = vld [vmem:[#allocation2 + $0x130] sm:$0xff]
          %v870 = vld [vmem:[#allocation2 + $0x138] sm:$0xff]
          %v871 = vld [vmem:[#allocation2 + $0x140] sm:$0xff]
          %v872 = vld [vmem:[#allocation2 + $0x148] sm:$0xff]
          %v873 = vld [vmem:[#allocation2 + $0x150] sm:$0xff]
          %v874 = vld [vmem:[#allocation2 + $0x158] sm:$0xff]
          %v875 = vld [vmem:[#allocation2 + $0x160] sm:$0xff]
          %v876 = vld [vmem:[#allocation2 + $0x168] sm:$0xff]
          %v877 = vld [vmem:[#allocation2 + $0x170] sm:$0xff]
          %v878 = vld [vmem:[#allocation2 + $0x178] sm:$0xff]
          %v879 = vld [vmem:[#allocation2 + $0x180] sm:$0xff]
          %v880 = vld [vmem:[#allocation2 + $0x188] sm:$0xff]
          %v881 = vld [vmem:[#allocation2 + $0x190] sm:$0xff]
          %v882 = vld [vmem:[#allocation2 + $0x198] sm:$0xff]
          %v883 = vld [vmem:[#allocation2 + $0x1a0] sm:$0xff]
          %v884 = vld [vmem:[#allocation2 + $0x1a8] sm:$0xff]
          %v885 = vld [vmem:[#allocation2 + $0x1b0] sm:$0xff]
          %v886 = vld [vmem:[#allocation2 + $0x1b8] sm:$0xff]
          %v887 = vld [vmem:[#allocation2 + $0x1c0] sm:$0xff]
          %v888 = vld [vmem:[#allocation2 + $0x1c8] sm:$0xff]
          %v889 = vld [vmem:[#allocation2 + $0x1d0] sm:$0xff]
          %v890 = vld [vmem:[#allocation2 + $0x1d8] sm:$0xff]
          %v891 = vld [vmem:[#allocation2 + $0x1e0] sm:$0xff]
          %v892 = vld [vmem:[#allocation2 + $0x1e8] sm:$0xff]
          %v893 = vld [vmem:[#allocation2 + $0x1f0] sm:$0xff]
          %v894 = vld [vmem:[#allocation2 + $0x1f8] sm:$0xff]
          %v895 = vld [vmem:[#allocation2 + $0x200] sm:$0xff]
          %v896 = vld [vmem:[#allocation2 + $0x208] sm:$0xff]
          %v897 = vld [vmem:[#allocation2 + $0x210] sm:$0xff]
          %v898 = vld [vmem:[#allocation2 + $0x218] sm:$0xff]
          %v899 = vld [vmem:[#allocation2 + $0x220] sm:$0xff]
          %v900 = vld [vmem:[#allocation2 + $0x228] sm:$0xff]
          %v901 = vmul.f32 %v866, 0.998001
          %v902 = vmul.f32 %v867, 0.998001
          %v903 = vmul.f32 %v868, 0.998001
          %v904 = vmul.f32 %v869, 0.998001
          %v905 = vmul.f32 %v870, 0.998001
          %v906 = vmul.f32 %v871, 0.998001
          %v907 = vmul.f32 %v872, 0.998001
          %v908 = vmul.f32 %v873, 0.998001
          %v909 = vmul.f32 %v874, 0.998001
          %v910 = vmul.f32 %v875, 0.998001
          %v911 = vmul.f32 %v876, 0.998001
          %v912 = vmul.f32 %v877, 0.998001
          %v913 = vmul.f32 %v878, 0.998001
          %v914 = vmul.f32 %v879, 0.998001
          %v915 = vmul.f32 %v880, 0.998001
          %v916 = vmul.f32 %v881, 0.998001
          %v917 = vmul.f32 %v882, 0.998001
          %v918 = vmul.f32 %v883, 0.998001
          %v919 = vmul.f32 %v884, 0.998001
          %v920 = vmul.f32 %v885, 0.998001
          %v921 = vmul.f32 %v886, 0.998001
          %v922 = vmul.f32 %v887, 0.998001
          %v923 = vmul.f32 %v888, 0.998001
          %v924 = vmul.f32 %v889, 0.998001
          %v925 = vmul.f32 %v890, 0.998001
          %v926 = vmul.f32 %v891, 0.998001
          %v927 = vmul.f32 %v892, 0.998001
          %v928 = vmul.f32 %v893, 0.998001
          %v929 = vmul.f32 %v894, 0.998001
          %v930 = vmul.f32 %v895, 0.998001
          %v931 = vmul.f32 %v896, 0.998001
          %v932 = vmul.f32 %v897, 0.998001
          %v933 = vmul.f32 %v898, 0.998001
          %v934 = vmul.f32 %v899, 0.998001
          %v935 = vmul.f32 %v900, 0.998001
          %v936 = vld [vmem:[#allocation5 + $0x118] sm:$0xff]
          %v937 = vld [vmem:[#allocation5 + $0x120] sm:$0xff]
          %v938 = vld [vmem:[#allocation5 + $0x128] sm:$0xff]
          %v939 = vld [vmem:[#allocation5 + $0x130] sm:$0xff]
          %v940 = vld [vmem:[#allocation5 + $0x138] sm:$0xff]
          %v941 = vld [vmem:[#allocation5 + $0x140] sm:$0xff]
          %v942 = vld [vmem:[#allocation5 + $0x148] sm:$0xff]
          %v943 = vld [vmem:[#allocation5 + $0x150] sm:$0xff]
          %v944 = vld [vmem:[#allocation5 + $0x158] sm:$0xff]
          %v945 = vld [vmem:[#allocation5 + $0x160] sm:$0xff]
          %v946 = vld [vmem:[#allocation5 + $0x168] sm:$0xff]
          %v947 = vld [vmem:[#allocation5 + $0x170] sm:$0xff]
          %v948 = vld [vmem:[#allocation5 + $0x178] sm:$0xff]
          %v949 = vld [vmem:[#allocation5 + $0x180] sm:$0xff]
          %v950 = vld [vmem:[#allocation5 + $0x188] sm:$0xff]
          %v951 = vld [vmem:[#allocation5 + $0x190] sm:$0xff]
          %v952 = vld [vmem:[#allocation5 + $0x198] sm:$0xff]
          %v953 = vld [vmem:[#allocation5 + $0x1a0] sm:$0xff]
          %v954 = vld [vmem:[#allocation5 + $0x1a8] sm:$0xff]
          %v955 = vld [vmem:[#allocation5 + $0x1b0] sm:$0xff]
          %v956 = vld [vmem:[#allocation5 + $0x1b8] sm:$0xff]
          %v957 = vld [vmem:[#allocation5 + $0x1c0] sm:$0xff]
          %v958 = vld [vmem:[#allocation5 + $0x1c8] sm:$0xff]
          %v959 = vld [vmem:[#allocation5 + $0x1d0] sm:$0xff]
          %v960 = vld [vmem:[#allocation5 + $0x1d8] sm:$0xff]
          %v961 = vld [vmem:[#allocation5 + $0x1e0] sm:$0xff]
          %v962 = vld [vmem:[#allocation5 + $0x1e8] sm:$0xff]
          %v963 = vld [vmem:[#allocation5 + $0x1f0] sm:$0xff]
          %v964 = vld [vmem:[#allocation5 + $0x1f8] sm:$0xff]
          %v965 = vld [vmem:[#allocation5 + $0x200] sm:$0xff]
          %v966 = vld [vmem:[#allocation5 + $0x208] sm:$0xff]
          %v967 = vld [vmem:[#allocation5 + $0x210] sm:$0xff]
          %v968 = vld [vmem:[#allocation5 + $0x218] sm:$0xff]
          %v969 = vld [vmem:[#allocation5 + $0x220] sm:$0xff]
          %v970 = vld [vmem:[#allocation5 + $0x228] sm:$0xff]
          %v971 = vmul.f32 %v936, 0.001999
          %v972 = vmul.f32 %v937, 0.001999
          %v973 = vmul.f32 %v938, 0.001999
          %v974 = vmul.f32 %v939, 0.001999
          %v975 = vmul.f32 %v940, 0.001999
          %v976 = vmul.f32 %v941, 0.001999
          %v977 = vmul.f32 %v942, 0.001999
          %v978 = vmul.f32 %v943, 0.001999
          %v979 = vmul.f32 %v944, 0.001999
          %v980 = vmul.f32 %v945, 0.001999
          %v981 = vmul.f32 %v946, 0.001999
          %v982 = vmul.f32 %v947, 0.001999
          %v983 = vmul.f32 %v948, 0.001999
          %v984 = vmul.f32 %v949, 0.001999
          %v985 = vmul.f32 %v950, 0.001999
          %v986 = vmul.f32 %v951, 0.001999
          %v987 = vmul.f32 %v952, 0.001999
          %v988 = vmul.f32 %v953, 0.001999
          %v989 = vmul.f32 %v954, 0.001999
          %v990 = vmul.f32 %v955, 0.001999
          %v991 = vmul.f32 %v956, 0.001999
          %v992 = vmul.f32 %v957, 0.001999
          %v993 = vmul.f32 %v958, 0.001999
          %v994 = vmul.f32 %v959, 0.001999
          %v995 = vmul.f32 %v960, 0.001999
          %v996 = vmul.f32 %v961, 0.001999
          %v997 = vmul.f32 %v962, 0.001999
          %v998 = vmul.f32 %v963, 0.001999
          %v999 = vmul.f32 %v964, 0.001999
          %v1000 = vmul.f32 %v965, 0.001999
          %v1001 = vmul.f32 %v966, 0.001999
          %v1002 = vmul.f32 %v967, 0.001999
          %v1003 = vmul.f32 %v968, 0.001999
          %v1004 = vmul.f32 %v969, 0.001999
          %v1005 = vmul.f32 %v970, 0.001999
          %v1006 = vadd.f32 %v901, %v971
          %v1007 = vadd.f32 %v902, %v972
          %v1008 = vadd.f32 %v903, %v973
          %v1009 = vadd.f32 %v904, %v974
          %v1010 = vadd.f32 %v905, %v975
          %v1011 = vadd.f32 %v906, %v976
          %v1012 = vadd.f32 %v907, %v977
          %v1013 = vadd.f32 %v908, %v978
          %v1014 = vadd.f32 %v909, %v979
          %v1015 = vadd.f32 %v910, %v980
          %v1016 = vadd.f32 %v911, %v981
          %v1017 = vadd.f32 %v912, %v982
          %v1018 = vadd.f32 %v913, %v983
          %v1019 = vadd.f32 %v914, %v984
          %v1020 = vadd.f32 %v915, %v985
          %v1021 = vadd.f32 %v916, %v986
          %v1022 = vadd.f32 %v917, %v987
          %v1023 = vadd.f32 %v918, %v988
          %v1024 = vadd.f32 %v919, %v989
          %v1025 = vadd.f32 %v920, %v990
          %v1026 = vadd.f32 %v921, %v991
          %v1027 = vadd.f32 %v922, %v992
          %v1028 = vadd.f32 %v923, %v993
          %v1029 = vadd.f32 %v924, %v994
          %v1030 = vadd.f32 %v925, %v995
          %v1031 = vadd.f32 %v926, %v996
          %v1032 = vadd.f32 %v927, %v997
          %v1033 = vadd.f32 %v928, %v998
          %v1034 = vadd.f32 %v929, %v999
          %v1035 = vadd.f32 %v930, %v1000
          %v1036 = vadd.f32 %v931, %v1001
          %v1037 = vadd.f32 %v932, %v1002
          %v1038 = vadd.f32 %v933, %v1003
          %v1039 = vadd.f32 %v934, %v1004
          %v1040 = vadd.f32 %v935, %v1005
          %1041 = vst [vmem:[%s237] sm:$0xff] %v1006
          %1042 = vst [vmem:[%s237 + $0x8] sm:$0xff] %v1007
          %1043 = vst [vmem:[%s237 + $0x10] sm:$0xff] %v1008
          %1044 = vst [vmem:[%s237 + $0x18] sm:$0xff] %v1009
          %1045 = vst [vmem:[%s237 + $0x20] sm:$0xff] %v1010
          %1046 = vst [vmem:[%s237 + $0x28] sm:$0xff] %v1011
          %1047 = vst [vmem:[%s237 + $0x30] sm:$0xff] %v1012
          %1048 = vst [vmem:[%s237 + $0x38] sm:$0xff] %v1013
          %1049 = vst [vmem:[%s237 + $0x40] sm:$0xff] %v1014
          %1050 = vst [vmem:[%s237 + $0x48] sm:$0xff] %v1015
          %1051 = vst [vmem:[%s237 + $0x50] sm:$0xff] %v1016
          %1052 = vst [vmem:[%s237 + $0x58] sm:$0xff] %v1017
          %1053 = vst [vmem:[%s237 + $0x60] sm:$0xff] %v1018
          %1054 = vst [vmem:[%s237 + $0x68] sm:$0xff] %v1019
          %1055 = vst [vmem:[%s237 + $0x70] sm:$0xff] %v1020
          %1056 = vst [vmem:[%s237 + $0x78] sm:$0xff] %v1021
          %1057 = vst [vmem:[%s237 + $0x80] sm:$0xff] %v1022
          %1058 = vst [vmem:[%s237 + $0x88] sm:$0xff] %v1023
          %1059 = vst [vmem:[%s237 + $0x90] sm:$0xff] %v1024
          %1060 = vst [vmem:[%s237 + $0x98] sm:$0xff] %v1025
          %1061 = vst [vmem:[%s237 + $0xa0] sm:$0xff] %v1026
          %1062 = vst [vmem:[%s237 + $0xa8] sm:$0xff] %v1027
          %1063 = vst [vmem:[%s237 + $0xb0] sm:$0xff] %v1028
          %1064 = vst [vmem:[%s237 + $0xb8] sm:$0xff] %v1029
          %1065 = vst [vmem:[%s237 + $0xc0] sm:$0xff] %v1030
          %1066 = vst [vmem:[%s237 + $0xc8] sm:$0xff] %v1031
          %1067 = vst [vmem:[%s237 + $0xd0] sm:$0xff] %v1032
          %1068 = vst [vmem:[%s237 + $0xd8] sm:$0xff] %v1033
          %1069 = vst [vmem:[%s237 + $0xe0] sm:$0xff] %v1034
          %1070 = vst [vmem:[%s237 + $0xe8] sm:$0xff] %v1035
          %1071 = vst [vmem:[%s237 + $0xf0] sm:$0xff] %v1036
          %1072 = vst [vmem:[%s237 + $0xf8] sm:$0xff] %v1037
          %1073 = vst [vmem:[%s237 + $0x100] sm:$0xff] %v1038
          %1074 = vst [vmem:[%s237 + $0x108] sm:$0xff] %v1039
          %1075 = vst [vmem:[%s237 + $0x110] sm:$0xff] %v1040
          %v1076 = vld [vmem:[%s0] sm:$0xff]
          %v1077 = vld [vmem:[%s0 + $0x8] sm:$0xff]
          %v1078 = vld [vmem:[%s0 + $0x10] sm:$0xff]
          %v1079 = vld [vmem:[%s0 + $0x18] sm:$0xff]
          %v1080 = vld [vmem:[#allocation2] sm:$0xff]
          %v1081 = vld [vmem:[#allocation2 + $0x8] sm:$0xff]
          %v1082 = vld [vmem:[#allocation2 + $0x10] sm:$0xff]
          %v1083 = vld [vmem:[#allocation2 + $0x18] sm:$0xff]
          %v1084 = vld [vmem:[#allocation2 + $0x20] sm:$0xff]
          %v1085 = vld [vmem:[#allocation2 + $0x28] sm:$0xff]
          %v1086 = vld [vmem:[#allocation2 + $0x30] sm:$0xff]
          %v1087 = vld [vmem:[#allocation2 + $0x38] sm:$0xff]
          %v1088 = vld [vmem:[#allocation2 + $0x40] sm:$0xff]
          %v1089 = vld [vmem:[#allocation2 + $0x48] sm:$0xff]
          %v1090 = vld [vmem:[#allocation2 + $0x50] sm:$0xff]
          %v1091 = vld [vmem:[#allocation2 + $0x58] sm:$0xff]
          %v1092 = vld [vmem:[#allocation2 + $0x60] sm:$0xff]
          %v1093 = vld [vmem:[#allocation2 + $0x68] sm:$0xff]
          %v1094 = vld [vmem:[#allocation2 + $0x70] sm:$0xff]
          %v1095 = vld [vmem:[#allocation2 + $0x78] sm:$0xff]
          %v1096 = vld [vmem:[#allocation2 + $0x80] sm:$0xff]
          %v1097 = vld [vmem:[#allocation2 + $0x88] sm:$0xff]
          %v1098 = vld [vmem:[#allocation2 + $0x90] sm:$0xff]
          %v1099 = vld [vmem:[#allocation2 + $0x98] sm:$0xff]
          %v1100 = vld [vmem:[#allocation2 + $0xa0] sm:$0xff]
          %v1101 = vld [vmem:[#allocation2 + $0xa8] sm:$0xff]
          %v1102 = vld [vmem:[#allocation2 + $0xb0] sm:$0xff]
          %v1103 = vld [vmem:[#allocation2 + $0xb8] sm:$0xff]
          %v1104 = vld [vmem:[#allocation2 + $0xc0] sm:$0xff]
          %v1105 = vld [vmem:[#allocation2 + $0xc8] sm:$0xff]
          %v1106 = vld [vmem:[#allocation2 + $0xd0] sm:$0xff]
          %v1107 = vld [vmem:[#allocation2 + $0xd8] sm:$0xff]
          %v1108 = vld [vmem:[#allocation2 + $0xe0] sm:$0xff]
          %v1109 = vld [vmem:[#allocation2 + $0xe8] sm:$0xff]
          %v1110 = vld [vmem:[#allocation2 + $0xf0] sm:$0xff]
          %v1111 = vld [vmem:[#allocation2 + $0xf8] sm:$0xff]
          %v1112 = vmul.f32 %v1080, 0.999
          %v1113 = vmul.f32 %v1081, 0.999
          %v1114 = vmul.f32 %v1082, 0.999
          %v1115 = vmul.f32 %v1083, 0.999
          %v1116 = vmul.f32 %v1084, 0.999
          %v1117 = vmul.f32 %v1085, 0.999
          %v1118 = vmul.f32 %v1086, 0.999
          %v1119 = vmul.f32 %v1087, 0.999
          %v1120 = vmul.f32 %v1088, 0.999
          %v1121 = vmul.f32 %v1089, 0.999
          %v1122 = vmul.f32 %v1090, 0.999
          %v1123 = vmul.f32 %v1091, 0.999
          %v1124 = vmul.f32 %v1092, 0.999
          %v1125 = vmul.f32 %v1093, 0.999
          %v1126 = vmul.f32 %v1094, 0.999
          %v1127 = vmul.f32 %v1095, 0.999
          %v1128 = vmul.f32 %v1096, 0.999
          %v1129 = vmul.f32 %v1097, 0.999
          %v1130 = vmul.f32 %v1098, 0.999
          %v1131 = vmul.f32 %v1099, 0.999
          %v1132 = vmul.f32 %v1100, 0.999
          %v1133 = vmul.f32 %v1101, 0.999
          %v1134 = vmul.f32 %v1102, 0.999
          %v1135 = vmul.f32 %v1103, 0.999
          %v1136 = vmul.f32 %v1104, 0.999
          %v1137 = vmul.f32 %v1105, 0.999
          %v1138 = vmul.f32 %v1106, 0.999
          %v1139 = vmul.f32 %v1107, 0.999
          %v1140 = vmul.f32 %v1108, 0.999
          %v1141 = vmul.f32 %v1109, 0.999
          %v1142 = vmul.f32 %v1110, 0.999
          %v1143 = vmul.f32 %v1111, 0.999
          %v1144 = vld [vmem:[#allocation5] sm:$0xff]
          %v1145 = vld [vmem:[#allocation5 + $0x8] sm:$0xff]
          %v1146 = vld [vmem:[#allocation5 + $0x10] sm:$0xff]
          %v1147 = vld [vmem:[#allocation5 + $0x18] sm:$0xff]
          %v1148 = vld [vmem:[#allocation5 + $0x20] sm:$0xff]
          %v1149 = vld [vmem:[#allocation5 + $0x28] sm:$0xff]
          %v1150 = vld [vmem:[#allocation5 + $0x30] sm:$0xff]
          %v1151 = vld [vmem:[#allocation5 + $0x38] sm:$0xff]
          %v1152 = vld [vmem:[#allocation5 + $0x40] sm:$0xff]
          %v1153 = vld [vmem:[#allocation5 + $0x48] sm:$0xff]
          %v1154 = vld [vmem:[#allocation5 + $0x50] sm:$0xff]
          %v1155 = vld [vmem:[#allocation5 + $0x58] sm:$0xff]
          %v1156 = vld [vmem:[#allocation5 + $0x60] sm:$0xff]
          %v1157 = vld [vmem:[#allocation5 + $0x68] sm:$0xff]
          %v1158 = vld [vmem:[#allocation5 + $0x70] sm:$0xff]
          %v1159 = vld [vmem:[#allocation5 + $0x78] sm:$0xff]
          %v1160 = vld [vmem:[#allocation5 + $0x80] sm:$0xff]
          %v1161 = vld [vmem:[#allocation5 + $0x88] sm:$0xff]
          %v1162 = vld [vmem:[#allocation5 + $0x90] sm:$0xff]
          %v1163 = vld [vmem:[#allocation5 + $0x98] sm:$0xff]
          %v1164 = vld [vmem:[#allocation5 + $0xa0] sm:$0xff]
          %v1165 = vld [vmem:[#allocation5 + $0xa8] sm:$0xff]
          %v1166 = vld [vmem:[#allocation5 + $0xb0] sm:$0xff]
          %v1167 = vld [vmem:[#allocation5 + $0xb8] sm:$0xff]
          %v1168 = vld [vmem:[#allocation5 + $0xc0] sm:$0xff]
          %v1169 = vld [vmem:[#allocation5 + $0xc8] sm:$0xff]
          %v1170 = vld [vmem:[#allocation5 + $0xd0] sm:$0xff]
          %v1171 = vld [vmem:[#allocation5 + $0xd8] sm:$0xff]
          %v1172 = vld [vmem:[#allocation5 + $0xe0] sm:$0xff]
          %v1173 = vld [vmem:[#allocation5 + $0xe8] sm:$0xff]
          %v1174 = vld [vmem:[#allocation5 + $0xf0] sm:$0xff]
          %v1175 = vld [vmem:[#allocation5 + $0xf8] sm:$0xff]
          %v1176 = vmul.f32 %v1144, 0.001
          %v1177 = vmul.f32 %v1145, 0.001
          %v1178 = vmul.f32 %v1146, 0.001
          %v1179 = vmul.f32 %v1147, 0.001
          %v1180 = vmul.f32 %v1148, 0.001
          %v1181 = vmul.f32 %v1149, 0.001
          %v1182 = vmul.f32 %v1150, 0.001
          %v1183 = vmul.f32 %v1151, 0.001
          %v1184 = vmul.f32 %v1152, 0.001
          %v1185 = vmul.f32 %v1153, 0.001
          %v1186 = vmul.f32 %v1154, 0.001
          %v1187 = vmul.f32 %v1155, 0.001
          %v1188 = vmul.f32 %v1156, 0.001
          %v1189 = vmul.f32 %v1157, 0.001
          %v1190 = vmul.f32 %v1158, 0.001
          %v1191 = vmul.f32 %v1159, 0.001
          %v1192 = vmul.f32 %v1160, 0.001
          %v1193 = vmul.f32 %v1161, 0.001
          %v1194 = vmul.f32 %v1162, 0.001
          %v1195 = vmul.f32 %v1163, 0.001
          %v1196 = vmul.f32 %v1164, 0.001
          %v1197 = vmul.f32 %v1165, 0.001
          %v1198 = vmul.f32 %v1166, 0.001
          %v1199 = vmul.f32 %v1167, 0.001
          %v1200 = vmul.f32 %v1168, 0.001
          %v1201 = vmul.f32 %v1169, 0.001
          %v1202 = vmul.f32 %v1170, 0.001
          %v1203 = vmul.f32 %v1171, 0.001
          %v1204 = vmul.f32 %v1172, 0.001
          %v1205 = vmul.f32 %v1173, 0.001
          %v1206 = vmul.f32 %v1174, 0.001
          %v1207 = vmul.f32 %v1175, 0.001
          %v1208 = vadd.f32 %v1112, %v1176
          %v1209 = vadd.f32 %v1113, %v1177
          %v1210 = vadd.f32 %v1114, %v1178
          %v1211 = vadd.f32 %v1115, %v1179
          %v1212 = vadd.f32 %v1116, %v1180
          %v1213 = vadd.f32 %v1117, %v1181
          %v1214 = vadd.f32 %v1118, %v1182
          %v1215 = vadd.f32 %v1119, %v1183
          %v1216 = vadd.f32 %v1120, %v1184
          %v1217 = vadd.f32 %v1121, %v1185
          %v1218 = vadd.f32 %v1122, %v1186
          %v1219 = vadd.f32 %v1123, %v1187
          %v1220 = vadd.f32 %v1124, %v1188
          %v1221 = vadd.f32 %v1125, %v1189
          %v1222 = vadd.f32 %v1126, %v1190
          %v1223 = vadd.f32 %v1127, %v1191
          %v1224 = vadd.f32 %v1128, %v1192
          %v1225 = vadd.f32 %v1129, %v1193
          %v1226 = vadd.f32 %v1130, %v1194
          %v1227 = vadd.f32 %v1131, %v1195
          %v1228 = vadd.f32 %v1132, %v1196
          %v1229 = vadd.f32 %v1133, %v1197
          %v1230 = vadd.f32 %v1134, %v1198
          %v1231 = vadd.f32 %v1135, %v1199
          %v1232 = vadd.f32 %v1136, %v1200
          %v1233 = vadd.f32 %v1137, %v1201
          %v1234 = vadd.f32 %v1138, %v1202
          %v1235 = vadd.f32 %v1139, %v1203
          %v1236 = vadd.f32 %v1140, %v1204
          %v1237 = vadd.f32 %v1141, %v1205
          %v1238 = vadd.f32 %v1142, %v1206
          %v1239 = vadd.f32 %v1143, %v1207
          %v1240 = vpack.c.bf16 %v1078, %v1078
          %v1241 = vpack.c.bf16 %v1079, %v1079
          %v1242 = vpack.c.bf16 %v1209, %v1208
          %v1243 = vpack.c.bf16 %v1211, %v1210
          %v1244 = vpack.c.bf16 %v1213, %v1212
          %v1245 = vpack.c.bf16 %v1215, %v1214
          %v1246 = vpack.c.bf16 %v1217, %v1216
          %v1247 = vpack.c.bf16 %v1219, %v1218
          %v1248 = vpack.c.bf16 %v1221, %v1220
          %v1249 = vpack.c.bf16 %v1223, %v1222
          %v1250 = vpack.c.bf16 %v1225, %v1224
          %v1251 = vpack.c.bf16 %v1227, %v1226
          %v1252 = vpack.c.bf16 %v1229, %v1228
          %v1253 = vpack.c.bf16 %v1231, %v1230
          %v1254 = vpack.c.bf16 %v1233, %v1232
          %v1255 = vpack.c.bf16 %v1235, %v1234
          %v1256 = vpack.c.bf16 %v1237, %v1236
          %v1257 = vpack.c.bf16 %v1239, %v1238
          %v1258 = vld [vmem:[#allocation2 + $0x100] sm:$0x1]
          %v1259 = vmul.f32 %v1258, 0.999
          %v1260 = vld [vmem:[#allocation5 + $0x100] sm:$0x1]
          %v1261 = vmul.f32 %v1260, 0.001
          %v1262 = vadd.f32 %v1259, %v1261
          %v1263 = vperm.slane %v1262, 0
          %1264 = vmatpush.bf16.msra.mxu0 %v1249
          %1265 = vmatpush.bf16.msra.mxu0 %v1248
          %1266 = vmatpush.bf16.msra.mxu0 %v1247
          %1267 = vmatpush.bf16.msra.mxu0 %v1246
          %1268 = vmatpush.bf16.msra.mxu0 %v1245
          %1269 = vmatpush.bf16.msra.mxu0 %v1244
          %1270 = vmatpush.bf16.msra.mxu0 %v1243
          %1271 = vmatpush.bf16.msra.mxu0 %v1242
          %1272 = vmatmul.bf16.gmra.mxu0 %v1240
          %v1273 = vpop.f32.mrf.mxu0
          %v1274 = vadd.f32 %v1263, %v1273
          %v1275 = vpop.f32.mrf.mxu0
          %1276 = vdwg.mxu0
          %1277 = vmatpush.bf16.msra.mxu0 %v1257
          %1278 = vmatpush.bf16.msra.mxu0 %v1256
          %1279 = vmatpush.bf16.msra.mxu0 %v1255
          %1280 = vmatpush.bf16.msra.mxu0 %v1254
          %1281 = vmatpush.bf16.msra.mxu0 %v1253
          %1282 = vmatpush.bf16.msra.mxu0 %v1252
          %1283 = vmatpush.bf16.msra.mxu0 %v1251
          %1284 = vmatpush.bf16.msra.mxu0 %v1250
          %1285 = vmatmul.bf16.gmra.mxu0 %v1241
          %v1286 = vpop.f32.mrf.mxu0
          %v1287 = vadd.f32 %v1274, %v1286
          %v1288 = vpop.f32.mrf.mxu0
          %1289 = vdwg.mxu0
          %v1290 = vld [vmem:[#allocation2 + $0x108] sm:$0xff]
          %v1291 = vld [vmem:[#allocation2 + $0x110] sm:$0xff]
          %v1292 = vld [vmem:[#allocation2 + $0x118] sm:$0xff]
          %v1293 = vld [vmem:[#allocation2 + $0x120] sm:$0xff]
          %v1294 = vld [vmem:[#allocation2 + $0x128] sm:$0xff]
          %v1295 = vld [vmem:[#allocation2 + $0x130] sm:$0xff]
          %v1296 = vld [vmem:[#allocation2 + $0x138] sm:$0xff]
          %v1297 = vld [vmem:[#allocation2 + $0x140] sm:$0xff]
          %v1298 = vld [vmem:[#allocation2 + $0x148] sm:$0xff]
          %v1299 = vld [vmem:[#allocation2 + $0x150] sm:$0xff]
          %v1300 = vld [vmem:[#allocation2 + $0x158] sm:$0xff]
          %v1301 = vld [vmem:[#allocation2 + $0x160] sm:$0xff]
          %v1302 = vld [vmem:[#allocation2 + $0x168] sm:$0xff]
          %v1303 = vld [vmem:[#allocation2 + $0x170] sm:$0xff]
          %v1304 = vld [vmem:[#allocation2 + $0x178] sm:$0xff]
          %v1305 = vld [vmem:[#allocation2 + $0x180] sm:$0xff]
          %v1306 = vmul.f32 %v1290, 0.999
          %v1307 = vmul.f32 %v1291, 0.999
          %v1308 = vmul.f32 %v1292, 0.999
          %v1309 = vmul.f32 %v1293, 0.999
          %v1310 = vmul.f32 %v1294, 0.999
          %v1311 = vmul.f32 %v1295, 0.999
          %v1312 = vmul.f32 %v1296, 0.999
          %v1313 = vmul.f32 %v1297, 0.999
          %v1314 = vmul.f32 %v1298, 0.999
          %v1315 = vmul.f32 %v1299, 0.999
          %v1316 = vmul.f32 %v1300, 0.999
          %v1317 = vmul.f32 %v1301, 0.999
          %v1318 = vmul.f32 %v1302, 0.999
          %v1319 = vmul.f32 %v1303, 0.999
          %v1320 = vmul.f32 %v1304, 0.999
          %v1321 = vmul.f32 %v1305, 0.999
          %v1322 = vld [vmem:[#allocation5 + $0x108] sm:$0xff]
          %v1323 = vld [vmem:[#allocation5 + $0x110] sm:$0xff]
          %v1324 = vld [vmem:[#allocation5 + $0x118] sm:$0xff]
          %v1325 = vld [vmem:[#allocation5 + $0x120] sm:$0xff]
          %v1326 = vld [vmem:[#allocation5 + $0x128] sm:$0xff]
          %v1327 = vld [vmem:[#allocation5 + $0x130] sm:$0xff]
          %v1328 = vld [vmem:[#allocation5 + $0x138] sm:$0xff]
          %v1329 = vld [vmem:[#allocation5 + $0x140] sm:$0xff]
          %v1330 = vld [vmem:[#allocation5 + $0x148] sm:$0xff]
          %v1331 = vld [vmem:[#allocation5 + $0x150] sm:$0xff]
          %v1332 = vld [vmem:[#allocation5 + $0x158] sm:$0xff]
          %v1333 = vld [vmem:[#allocation5 + $0x160] sm:$0xff]
          %v1334 = vld [vmem:[#allocation5 + $0x168] sm:$0xff]
          %v1335 = vld [vmem:[#allocation5 + $0x170] sm:$0xff]
          %v1336 = vld [vmem:[#allocation5 + $0x178] sm:$0xff]
          %v1337 = vld [vmem:[#allocation5 + $0x180] sm:$0xff]
          %v1338 = vmul.f32 %v1322, 0.001
          %v1339 = vmul.f32 %v1323, 0.001
          %v1340 = vmul.f32 %v1324, 0.001
          %v1341 = vmul.f32 %v1325, 0.001
          %v1342 = vmul.f32 %v1326, 0.001
          %v1343 = vmul.f32 %v1327, 0.001
          %v1344 = vmul.f32 %v1328, 0.001
          %v1345 = vmul.f32 %v1329, 0.001
          %v1346 = vmul.f32 %v1330, 0.001
          %v1347 = vmul.f32 %v1331, 0.001
          %v1348 = vmul.f32 %v1332, 0.001
          %v1349 = vmul.f32 %v1333, 0.001
          %v1350 = vmul.f32 %v1334, 0.001
          %v1351 = vmul.f32 %v1335, 0.001
          %v1352 = vmul.f32 %v1336, 0.001
          %v1353 = vmul.f32 %v1337, 0.001
          %v1354 = vadd.f32 %v1306, %v1338
          %v1355 = vadd.f32 %v1307, %v1339
          %v1356 = vadd.f32 %v1308, %v1340
          %v1357 = vadd.f32 %v1309, %v1341
          %v1358 = vadd.f32 %v1310, %v1342
          %v1359 = vadd.f32 %v1311, %v1343
          %v1360 = vadd.f32 %v1312, %v1344
          %v1361 = vadd.f32 %v1313, %v1345
          %v1362 = vadd.f32 %v1314, %v1346
          %v1363 = vadd.f32 %v1315, %v1347
          %v1364 = vadd.f32 %v1316, %v1348
          %v1365 = vadd.f32 %v1317, %v1349
          %v1366 = vadd.f32 %v1318, %v1350
          %v1367 = vadd.f32 %v1319, %v1351
          %v1368 = vadd.f32 %v1320, %v1352
          %v1369 = vadd.f32 %v1321, %v1353
          %v1370 = vld [vmem:[#allocation2 + $0x188] sm:$0x1]
          %v1371 = vmul.f32 %v1370, 0.999
          %v1372 = vld [vmem:[#allocation5 + $0x188] sm:$0x1]
          %v1373 = vmul.f32 %v1372, 0.001
          %v1374 = vadd.f32 %v1371, %v1373
          %v1375 = vld [vmem:[#allocation2 + $0x190] sm:$0x1]
          %v1376 = vmul.f32 %v1375, 0.999
          %v1377 = vld [vmem:[#allocation5 + $0x190] sm:$0x1]
          %v1378 = vmul.f32 %v1377, 0.001
          %v1379 = vadd.f32 %v1376, %v1378
          %v1380 = vld [vmem:[#allocation2 + $0x198] sm:$0x1]
          %v1381 = vmul.f32 %v1380, 0.999
          %v1382 = vld [vmem:[#allocation5 + $0x198] sm:$0x1]
          %v1383 = vmul.f32 %v1382, 0.001
          %v1384 = vadd.f32 %v1381, %v1383
          %v1385 = vld [vmem:[#allocation2 + $0x1a0] sm:$0xff]
          %v1386 = vld [vmem:[#allocation2 + $0x1a8] sm:$0xff]
          %v1387 = vld [vmem:[#allocation2 + $0x1b0] sm:$0xff]
          %v1388 = vld [vmem:[#allocation2 + $0x1b8] sm:$0xff]
          %v1389 = vld [vmem:[#allocation2 + $0x1c0] sm:$0xff]
          %v1390 = vld [vmem:[#allocation2 + $0x1c8] sm:$0xff]
          %v1391 = vld [vmem:[#allocation2 + $0x1d0] sm:$0xff]
          %v1392 = vld [vmem:[#allocation2 + $0x1d8] sm:$0xff]
          %v1393 = vld [vmem:[#allocation2 + $0x1e0] sm:$0xff]
          %v1394 = vld [vmem:[#allocation2 + $0x1e8] sm:$0xff]
          %v1395 = vld [vmem:[#allocation2 + $0x1f0] sm:$0xff]
          %v1396 = vld [vmem:[#allocation2 + $0x1f8] sm:$0xff]
          %v1397 = vld [vmem:[#allocation2 + $0x200] sm:$0xff]
          %v1398 = vld [vmem:[#allocation2 + $0x208] sm:$0xff]
          %v1399 = vld [vmem:[#allocation2 + $0x210] sm:$0xff]
          %v1400 = vld [vmem:[#allocation2 + $0x218] sm:$0xff]
          %v1401 = vmul.f32 %v1385, 0.999
          %v1402 = vmul.f32 %v1386, 0.999
          %v1403 = vmul.f32 %v1387, 0.999
          %v1404 = vmul.f32 %v1388, 0.999
          %v1405 = vmul.f32 %v1389, 0.999
          %v1406 = vmul.f32 %v1390, 0.999
          %v1407 = vmul.f32 %v1391, 0.999
          %v1408 = vmul.f32 %v1392, 0.999
          %v1409 = vmul.f32 %v1393, 0.999
          %v1410 = vmul.f32 %v1394, 0.999
          %v1411 = vmul.f32 %v1395, 0.999
          %v1412 = vmul.f32 %v1396, 0.999
          %v1413 = vmul.f32 %v1397, 0.999
          %v1414 = vmul.f32 %v1398, 0.999
          %v1415 = vmul.f32 %v1399, 0.999
          %v1416 = vmul.f32 %v1400, 0.999
          %v1417 = vld [vmem:[#allocation5 + $0x1a0] sm:$0xff]
          %v1418 = vld [vmem:[#allocation5 + $0x1a8] sm:$0xff]
          %v1419 = vld [vmem:[#allocation5 + $0x1b0] sm:$0xff]
          %v1420 = vld [vmem:[#allocation5 + $0x1b8] sm:$0xff]
          %v1421 = vld [vmem:[#allocation5 + $0x1c0] sm:$0xff]
          %v1422 = vld [vmem:[#allocation5 + $0x1c8] sm:$0xff]
          %v1423 = vld [vmem:[#allocation5 + $0x1d0] sm:$0xff]
          %v1424 = vld [vmem:[#allocation5 + $0x1d8] sm:$0xff]
          %v1425 = vld [vmem:[#allocation5 + $0x1e0] sm:$0xff]
          %v1426 = vld [vmem:[#allocation5 + $0x1e8] sm:$0xff]
          %v1427 = vld [vmem:[#allocation5 + $0x1f0] sm:$0xff]
          %v1428 = vld [vmem:[#allocation5 + $0x1f8] sm:$0xff]
          %v1429 = vld [vmem:[#allocation5 + $0x200] sm:$0xff]
          %v1430 = vld [vmem:[#allocation5 + $0x208] sm:$0xff]
          %v1431 = vld [vmem:[#allocation5 + $0x210] sm:$0xff]
          %v1432 = vld [vmem:[#allocation5 + $0x218] sm:$0xff]
          %v1433 = vmul.f32 %v1417, 0.001
          %v1434 = vmul.f32 %v1418, 0.001
          %v1435 = vmul.f32 %v1419, 0.001
          %v1436 = vmul.f32 %v1420, 0.001
          %v1437 = vmul.f32 %v1421, 0.001
          %v1438 = vmul.f32 %v1422, 0.001
          %v1439 = vmul.f32 %v1423, 0.001
          %v1440 = vmul.f32 %v1424, 0.001
          %v1441 = vmul.f32 %v1425, 0.001
          %v1442 = vmul.f32 %v1426, 0.001
          %v1443 = vmul.f32 %v1427, 0.001
          %v1444 = vmul.f32 %v1428, 0.001
          %v1445 = vmul.f32 %v1429, 0.001
          %v1446 = vmul.f32 %v1430, 0.001
          %v1447 = vmul.f32 %v1431, 0.001
          %v1448 = vmul.f32 %v1432, 0.001
          %v1449 = vadd.f32 %v1401, %v1433
          %v1450 = vadd.f32 %v1402, %v1434
          %v1451 = vadd.f32 %v1403, %v1435
          %v1452 = vadd.f32 %v1404, %v1436
          %v1453 = vadd.f32 %v1405, %v1437
          %v1454 = vadd.f32 %v1406, %v1438
          %v1455 = vadd.f32 %v1407, %v1439
          %v1456 = vadd.f32 %v1408, %v1440
          %v1457 = vadd.f32 %v1409, %v1441
          %v1458 = vadd.f32 %v1410, %v1442
          %v1459 = vadd.f32 %v1411, %v1443
          %v1460 = vadd.f32 %v1412, %v1444
          %v1461 = vadd.f32 %v1413, %v1445
          %v1462 = vadd.f32 %v1414, %v1446
          %v1463 = vadd.f32 %v1415, %v1447
          %v1464 = vadd.f32 %v1416, %v1448
          %v1465 = vld [vmem:[#allocation2 + $0x220] sm:$0x1]
          %v1466 = vmul.f32 %v1465, 0.999
          %v1467 = vld [vmem:[#allocation5 + $0x220] sm:$0x1]
          %v1468 = vmul.f32 %v1467, 0.001
          %v1469 = vadd.f32 %v1466, %v1468
          %v1470 = vpack.c.bf16 %v1287, %v1287
          %v1471 = vpack.c.bf16 %v1355, %v1354
          %v1472 = vpack.c.bf16 %v1357, %v1356
          %v1473 = vpack.c.bf16 %v1359, %v1358
          %v1474 = vpack.c.bf16 %v1361, %v1360
          %v1475 = vpack.c.bf16 %v1363, %v1362
          %v1476 = vpack.c.bf16 %v1365, %v1364
          %v1477 = vpack.c.bf16 %v1367, %v1366
          %v1478 = vpack.c.bf16 %v1369, %v1368
          %v1479 = vperm.slane %v1374, 0
          %1480 = vmatpush.bf16.msra.mxu0 %v1478
          %1481 = vmatpush.bf16.msra.mxu0 %v1477
          %1482 = vmatpush.bf16.msra.mxu0 %v1476
          %1483 = vmatpush.bf16.msra.mxu0 %v1475
          %1484 = vmatpush.bf16.msra.mxu0 %v1474
          %1485 = vmatpush.bf16.msra.mxu0 %v1473
          %1486 = vmatpush.bf16.msra.mxu0 %v1472
          %1487 = vmatpush.bf16.msra.mxu0 %v1471
          %1488 = vmatmul.bf16.gmra.mxu0 %v1470
          %v1489 = vpop.f32.mrf.mxu0
          %v1490 = vadd.f32 %v1479, %v1489
          %v1491 = vpop.f32.mrf.mxu0
          %1492 = vdwg.mxu0
          %v1493 = vrot.slane %v1490, 4
          %v1494 = vadd.f32 %v1490, %v1493
          %v1495 = vrot.slane %v1494, 2
          %v1496 = vadd.f32 %v1494, %v1495
          %v1497 = vrot.slane %v1496, 1
          %v1498 = vadd.f32 %v1496, %v1497
          %v1499 = vrcp.pop 8.0
          %v1500 = vmul.f32 8.0, %v1499
          %v1501 = vsub.f32 1.0, %v1500
          %v1502 = vmul.f32 %v1499, %v1501
          %v1503 = vadd.f32 %v1499, %v1502
          %vm1504 = vweird.f32 %v1499
          %v1505 = vsel %vm1504, %v1499, %v1503
          %v1506 = vmul.f32 %v1498, %v1505
          %v1507 = vmul.f32 %v1490, %v1490
          %v1508 = vrot.slane %v1507, 4
          %v1509 = vadd.f32 %v1507, %v1508
          %v1510 = vrot.slane %v1509, 2
          %v1511 = vadd.f32 %v1509, %v1510
          %v1512 = vrot.slane %v1511, 1
          %v1513 = vadd.f32 %v1511, %v1512
          %v1514 = vmul.f32 %v1513, %v1505
          %v1515 = vmul.f32 %v1506, %v1506
          %v1516 = vsub.f32 %v1514, %v1515
          %v1517 = vsub.f32 %v1490, %v1506
          %v1518 = vadd.f32 %v1516, 1e-05
          %v1519 = vrsqrt.pop %v1518
          %v1520 = vmul.f32 %v1519, %v1518
          %v1521 = vmul.f32 %v1520, %v1519
          %v1522 = vmul.f32 0.5, %v1521
          %v1523 = vsub.f32 1.5, %v1522
          %v1524 = vmul.f32 %v1519, %v1523
          %vm1525 = vweird.f32 %v1518
          %vm1526 = vweird.f32 %v1519
          %vm1527 = vmor %vm1525, %vm1526
          %v1528 = vsel %vm1527, %v1519, %v1524
          %v1529 = vmul.f32 %v1517, %v1528
          %v1530 = vperm.slane %v1379, 0
          %v1531 = vmul.f32 %v1530, %v1529
          %v1532 = vperm.slane %v1384, 0
          %v1533 = vadd.f32 %v1531, %v1532
          %v1534 = vmax.f32 %v1533, 0.0
          %v1535 = vpack.c.bf16 %v1534, %v1534
          %v1536 = vpack.c.bf16 %v1450, %v1449
          %v1537 = vpack.c.bf16 %v1452, %v1451
          %v1538 = vpack.c.bf16 %v1454, %v1453
          %v1539 = vpack.c.bf16 %v1456, %v1455
          %v1540 = vpack.c.bf16 %v1458, %v1457
          %v1541 = vpack.c.bf16 %v1460, %v1459
          %v1542 = vpack.c.bf16 %v1462, %v1461
          %v1543 = vpack.c.bf16 %v1464, %v1463
          %v1544 = vperm.slane %v1469, 0
          %1545 = vmatpush.bf16.msra.mxu0 %v1543
          %1546 = vmatpush.bf16.msra.mxu0 %v1542
          %1547 = vmatpush.bf16.msra.mxu0 %v1541
          %1548 = vmatpush.bf16.msra.mxu0 %v1540
          %1549 = vmatpush.bf16.msra.mxu0 %v1539
          %1550 = vmatpush.bf16.msra.mxu0 %v1538
          %1551 = vmatpush.bf16.msra.mxu0 %v1537
          %1552 = vmatpush.bf16.msra.mxu0 %v1536
          %1553 = vmatmul.bf16.gmra.mxu0 %v1535
          %v1554 = vpop.f32.mrf.mxu0
          %v1555 = vadd.f32 %v1544, %v1554
          %v1556 = vpop.f32.mrf.mxu0
          %1557 = vdwg.mxu0
          %v1558 = vmul.f32 %v1080, 0.998001
          %v1559 = vmul.f32 %v1081, 0.998001
          %v1560 = vmul.f32 %v1082, 0.998001
          %v1561 = vmul.f32 %v1083, 0.998001
          %v1562 = vmul.f32 %v1084, 0.998001
          %v1563 = vmul.f32 %v1085, 0.998001
          %v1564 = vmul.f32 %v1086, 0.998001
          %v1565 = vmul.f32 %v1087, 0.998001
          %v1566 = vmul.f32 %v1088, 0.998001
          %v1567 = vmul.f32 %v1089, 0.998001
          %v1568 = vmul.f32 %v1090, 0.998001
          %v1569 = vmul.f32 %v1091, 0.998001
          %v1570 = vmul.f32 %v1092, 0.998001
          %v1571 = vmul.f32 %v1093, 0.998001
          %v1572 = vmul.f32 %v1094, 0.998001
          %v1573 = vmul.f32 %v1095, 0.998001
          %v1574 = vmul.f32 %v1096, 0.998001
          %v1575 = vmul.f32 %v1097, 0.998001
          %v1576 = vmul.f32 %v1098, 0.998001
          %v1577 = vmul.f32 %v1099, 0.998001
          %v1578 = vmul.f32 %v1100, 0.998001
          %v1579 = vmul.f32 %v1101, 0.998001
          %v1580 = vmul.f32 %v1102, 0.998001
          %v1581 = vmul.f32 %v1103, 0.998001
          %v1582 = vmul.f32 %v1104, 0.998001
          %v1583 = vmul.f32 %v1105, 0.998001
          %v1584 = vmul.f32 %v1106, 0.998001
          %v1585 = vmul.f32 %v1107, 0.998001
          %v1586 = vmul.f32 %v1108, 0.998001
          %v1587 = vmul.f32 %v1109, 0.998001
          %v1588 = vmul.f32 %v1110, 0.998001
          %v1589 = vmul.f32 %v1111, 0.998001
          %v1590 = vmul.f32 %v1144, 0.001999
          %v1591 = vmul.f32 %v1145, 0.001999
          %v1592 = vmul.f32 %v1146, 0.001999
          %v1593 = vmul.f32 %v1147, 0.001999
          %v1594 = vmul.f32 %v1148, 0.001999
          %v1595 = vmul.f32 %v1149, 0.001999
          %v1596 = vmul.f32 %v1150, 0.001999
          %v1597 = vmul.f32 %v1151, 0.001999
          %v1598 = vmul.f32 %v1152, 0.001999
          %v1599 = vmul.f32 %v1153, 0.001999
          %v1600 = vmul.f32 %v1154, 0.001999
          %v1601 = vmul.f32 %v1155, 0.001999
          %v1602 = vmul.f32 %v1156, 0.001999
          %v1603 = vmul.f32 %v1157, 0.001999
          %v1604 = vmul.f32 %v1158, 0.001999
          %v1605 = vmul.f32 %v1159, 0.001999
          %v1606 = vmul.f32 %v1160, 0.001999
          %v1607 = vmul.f32 %v1161, 0.001999
          %v1608 = vmul.f32 %v1162, 0.001999
          %v1609 = vmul.f32 %v1163, 0.001999
          %v1610 = vmul.f32 %v1164, 0.001999
          %v1611 = vmul.f32 %v1165, 0.001999
          %v1612 = vmul.f32 %v1166, 0.001999
          %v1613 = vmul.f32 %v1167, 0.001999
          %v1614 = vmul.f32 %v1168, 0.001999
          %v1615 = vmul.f32 %v1169, 0.001999
          %v1616 = vmul.f32 %v1170, 0.001999
          %v1617 = vmul.f32 %v1171, 0.001999
          %v1618 = vmul.f32 %v1172, 0.001999
          %v1619 = vmul.f32 %v1173, 0.001999
          %v1620 = vmul.f32 %v1174, 0.001999
          %v1621 = vmul.f32 %v1175, 0.001999
          %v1622 = vadd.f32 %v1558, %v1590
          %v1623 = vadd.f32 %v1559, %v1591
          %v1624 = vadd.f32 %v1560, %v1592
          %v1625 = vadd.f32 %v1561, %v1593
          %v1626 = vadd.f32 %v1562, %v1594
          %v1627 = vadd.f32 %v1563, %v1595
          %v1628 = vadd.f32 %v1564, %v1596
          %v1629 = vadd.f32 %v1565, %v1597
          %v1630 = vadd.f32 %v1566, %v1598
          %v1631 = vadd.f32 %v1567, %v1599
          %v1632 = vadd.f32 %v1568, %v1600
          %v1633 = vadd.f32 %v1569, %v1601
          %v1634 = vadd.f32 %v1570, %v1602
          %v1635 = vadd.f32 %v1571, %v1603
          %v1636 = vadd.f32 %v1572, %v1604
          %v1637 = vadd.f32 %v1573, %v1605
          %v1638 = vadd.f32 %v1574, %v1606
          %v1639 = vadd.f32 %v1575, %v1607
          %v1640 = vadd.f32 %v1576, %v1608
          %v1641 = vadd.f32 %v1577, %v1609
          %v1642 = vadd.f32 %v1578, %v1610
          %v1643 = vadd.f32 %v1579, %v1611
          %v1644 = vadd.f32 %v1580, %v1612
          %v1645 = vadd.f32 %v1581, %v1613
          %v1646 = vadd.f32 %v1582, %v1614
          %v1647 = vadd.f32 %v1583, %v1615
          %v1648 = vadd.f32 %v1584, %v1616
          %v1649 = vadd.f32 %v1585, %v1617
          %v1650 = vadd.f32 %v1586, %v1618
          %v1651 = vadd.f32 %v1587, %v1619
          %v1652 = vadd.f32 %v1588, %v1620
          %v1653 = vadd.f32 %v1589, %v1621
          %v1654 = vpack.c.bf16 %v1076, %v1076
          %v1655 = vpack.c.bf16 %v1077, %v1077
          %v1656 = vpack.c.bf16 %v1623, %v1622
          %v1657 = vpack.c.bf16 %v1625, %v1624
          %v1658 = vpack.c.bf16 %v1627, %v1626
          %v1659 = vpack.c.bf16 %v1629, %v1628
          %v1660 = vpack.c.bf16 %v1631, %v1630
          %v1661 = vpack.c.bf16 %v1633, %v1632
          %v1662 = vpack.c.bf16 %v1635, %v1634
          %v1663 = vpack.c.bf16 %v1637, %v1636
          %v1664 = vpack.c.bf16 %v1639, %v1638
          %v1665 = vpack.c.bf16 %v1641, %v1640
          %v1666 = vpack.c.bf16 %v1643, %v1642
          %v1667 = vpack.c.bf16 %v1645, %v1644
          %v1668 = vpack.c.bf16 %v1647, %v1646
          %v1669 = vpack.c.bf16 %v1649, %v1648
          %v1670 = vpack.c.bf16 %v1651, %v1650
          %v1671 = vpack.c.bf16 %v1653, %v1652
          %v1672 = vmul.f32 %v1258, 0.998001
          %v1673 = vmul.f32 %v1260, 0.001999
          %v1674 = vadd.f32 %v1672, %v1673
          %v1675 = vperm.slane %v1674, 0
          %1676 = vmatpush.bf16.msra.mxu0 %v1663
          %1677 = vmatpush.bf16.msra.mxu0 %v1662
          %1678 = vmatpush.bf16.msra.mxu0 %v1661
          %1679 = vmatpush.bf16.msra.mxu0 %v1660
          %1680 = vmatpush.bf16.msra.mxu0 %v1659
          %1681 = vmatpush.bf16.msra.mxu0 %v1658
          %1682 = vmatpush.bf16.msra.mxu0 %v1657
          %1683 = vmatpush.bf16.msra.mxu0 %v1656
          %1684 = vmatmul.bf16.gmra.mxu0 %v1654
          %v1685 = vpop.f32.mrf.mxu0
          %v1686 = vadd.f32 %v1675, %v1685
          %v1687 = vpop.f32.mrf.mxu0
          %1688 = vdwg.mxu0
          %1689 = vmatpush.bf16.msra.mxu0 %v1671
          %1690 = vmatpush.bf16.msra.mxu0 %v1670
          %1691 = vmatpush.bf16.msra.mxu0 %v1669
          %1692 = vmatpush.bf16.msra.mxu0 %v1668
          %1693 = vmatpush.bf16.msra.mxu0 %v1667
          %1694 = vmatpush.bf16.msra.mxu0 %v1666
          %1695 = vmatpush.bf16.msra.mxu0 %v1665
          %1696 = vmatpush.bf16.msra.mxu0 %v1664
          %1697 = vmatmul.bf16.gmra.mxu0 %v1655
          %v1698 = vpop.f32.mrf.mxu0
          %v1699 = vadd.f32 %v1686, %v1698
          %v1700 = vpop.f32.mrf.mxu0
          %1701 = vdwg.mxu0
          %v1702 = vmul.f32 %v1290, 0.998001
          %v1703 = vmul.f32 %v1291, 0.998001
          %v1704 = vmul.f32 %v1292, 0.998001
          %v1705 = vmul.f32 %v1293, 0.998001
          %v1706 = vmul.f32 %v1294, 0.998001
          %v1707 = vmul.f32 %v1295, 0.998001
          %v1708 = vmul.f32 %v1296, 0.998001
          %v1709 = vmul.f32 %v1297, 0.998001
          %v1710 = vmul.f32 %v1298, 0.998001
          %v1711 = vmul.f32 %v1299, 0.998001
          %v1712 = vmul.f32 %v1300, 0.998001
          %v1713 = vmul.f32 %v1301, 0.998001
          %v1714 = vmul.f32 %v1302, 0.998001
          %v1715 = vmul.f32 %v1303, 0.998001
          %v1716 = vmul.f32 %v1304, 0.998001
          %v1717 = vmul.f32 %v1305, 0.998001
          %v1718 = vmul.f32 %v1322, 0.001999
          %v1719 = vmul.f32 %v1323, 0.001999
          %v1720 = vmul.f32 %v1324, 0.001999
          %v1721 = vmul.f32 %v1325, 0.001999
          %v1722 = vmul.f32 %v1326, 0.001999
          %v1723 = vmul.f32 %v1327, 0.001999
          %v1724 = vmul.f32 %v1328, 0.001999
          %v1725 = vmul.f32 %v1329, 0.001999
          %v1726 = vmul.f32 %v1330, 0.001999
          %v1727 = vmul.f32 %v1331, 0.001999
          %v1728 = vmul.f32 %v1332, 0.001999
          %v1729 = vmul.f32 %v1333, 0.001999
          %v1730 = vmul.f32 %v1334, 0.001999
          %v1731 = vmul.f32 %v1335, 0.001999
          %v1732 = vmul.f32 %v1336, 0.001999
          %v1733 = vmul.f32 %v1337, 0.001999
          %v1734 = vadd.f32 %v1702, %v1718
          %v1735 = vadd.f32 %v1703, %v1719
          %v1736 = vadd.f32 %v1704, %v1720
          %v1737 = vadd.f32 %v1705, %v1721
          %v1738 = vadd.f32 %v1706, %v1722
          %v1739 = vadd.f32 %v1707, %v1723
          %v1740 = vadd.f32 %v1708, %v1724
          %v1741 = vadd.f32 %v1709, %v1725
          %v1742 = vadd.f32 %v1710, %v1726
          %v1743 = vadd.f32 %v1711, %v1727
          %v1744 = vadd.f32 %v1712, %v1728
          %v1745 = vadd.f32 %v1713, %v1729
          %v1746 = vadd.f32 %v1714, %v1730
          %v1747 = vadd.f32 %v1715, %v1731
          %v1748 = vadd.f32 %v1716, %v1732
          %v1749 = vadd.f32 %v1717, %v1733
          %v1750 = vmul.f32 %v1370, 0.998001
          %v1751 = vmul.f32 %v1372, 0.001999
          %v1752 = vadd.f32 %v1750, %v1751
          %v1753 = vmul.f32 %v1375, 0.998001
          %v1754 = vmul.f32 %v1377, 0.001999
          %v1755 = vadd.f32 %v1753, %v1754
          %v1756 = vmul.f32 %v1380, 0.998001
          %v1757 = vmul.f32 %v1382, 0.001999
          %v1758 = vadd.f32 %v1756, %v1757
          %v1759 = vmul.f32 %v1385, 0.998001
          %v1760 = vmul.f32 %v1386, 0.998001
          %v1761 = vmul.f32 %v1387, 0.998001
          %v1762 = vmul.f32 %v1388, 0.998001
          %v1763 = vmul.f32 %v1389, 0.998001
          %v1764 = vmul.f32 %v1390, 0.998001
          %v1765 = vmul.f32 %v1391, 0.998001
          %v1766 = vmul.f32 %v1392, 0.998001
          %v1767 = vmul.f32 %v1393, 0.998001
          %v1768 = vmul.f32 %v1394, 0.998001
          %v1769 = vmul.f32 %v1395, 0.998001
          %v1770 = vmul.f32 %v1396, 0.998001
          %v1771 = vmul.f32 %v1397, 0.998001
          %v1772 = vmul.f32 %v1398, 0.998001
          %v1773 = vmul.f32 %v1399, 0.998001
          %v1774 = vmul.f32 %v1400, 0.998001
          %v1775 = vmul.f32 %v1417, 0.001999
          %v1776 = vmul.f32 %v1418, 0.001999
          %v1777 = vmul.f32 %v1419, 0.001999
          %v1778 = vmul.f32 %v1420, 0.001999
          %v1779 = vmul.f32 %v1421, 0.001999
          %v1780 = vmul.f32 %v1422, 0.001999
          %v1781 = vmul.f32 %v1423, 0.001999
          %v1782 = vmul.f32 %v1424, 0.001999
          %v1783 = vmul.f32 %v1425, 0.001999
          %v1784 = vmul.f32 %v1426, 0.001999
          %v1785 = vmul.f32 %v1427, 0.001999
          %v1786 = vmul.f32 %v1428, 0.001999
          %v1787 = vmul.f32 %v1429, 0.001999
          %v1788 = vmul.f32 %v1430, 0.001999
          %v1789 = vmul.f32 %v1431, 0.001999
          %v1790 = vmul.f32 %v1432, 0.001999
          %v1791 = vadd.f32 %v1759, %v1775
          %v1792 = vadd.f32 %v1760, %v1776
          %v1793 = vadd.f32 %v1761, %v1777
          %v1794 = vadd.f32 %v1762, %v1778
          %v1795 = vadd.f32 %v1763, %v1779
          %v1796 = vadd.f32 %v1764, %v1780
          %v1797 = vadd.f32 %v1765, %v1781
          %v1798 = vadd.f32 %v1766, %v1782
          %v1799 = vadd.f32 %v1767, %v1783
          %v1800 = vadd.f32 %v1768, %v1784
          %v1801 = vadd.f32 %v1769, %v1785
          %v1802 = vadd.f32 %v1770, %v1786
          %v1803 = vadd.f32 %v1771, %v1787
          %v1804 = vadd.f32 %v1772, %v1788
          %v1805 = vadd.f32 %v1773, %v1789
          %v1806 = vadd.f32 %v1774, %v1790
          %v1807 = vmul.f32 %v1465, 0.998001
          %v1808 = vmul.f32 %v1467, 0.001999
          %v1809 = vadd.f32 %v1807, %v1808
          %v1810 = vpack.c.bf16 %v1699, %v1699
          %v1811 = vpack.c.bf16 %v1735, %v1734
          %v1812 = vpack.c.bf16 %v1737, %v1736
          %v1813 = vpack.c.bf16 %v1739, %v1738
          %v1814 = vpack.c.bf16 %v1741, %v1740
          %v1815 = vpack.c.bf16 %v1743, %v1742
          %v1816 = vpack.c.bf16 %v1745, %v1744
          %v1817 = vpack.c.bf16 %v1747, %v1746
          %v1818 = vpack.c.bf16 %v1749, %v1748
          %v1819 = vperm.slane %v1752, 0
          %1820 = vmatpush.bf16.msra.mxu0 %v1818
          %1821 = vmatpush.bf16.msra.mxu0 %v1817
          %1822 = vmatpush.bf16.msra.mxu0 %v1816
          %1823 = vmatpush.bf16.msra.mxu0 %v1815
          %1824 = vmatpush.bf16.msra.mxu0 %v1814
          %1825 = vmatpush.bf16.msra.mxu0 %v1813
          %1826 = vmatpush.bf16.msra.mxu0 %v1812
          %1827 = vmatpush.bf16.msra.mxu0 %v1811
          %1828 = vmatmul.bf16.gmra.mxu0 %v1810
          %v1829 = vpop.f32.mrf.mxu0
          %v1830 = vadd.f32 %v1819, %v1829
          %v1831 = vpop.f32.mrf.mxu0
          %1832 = vdwg.mxu0
          %v1833 = vrot.slane %v1830, 4
          %v1834 = vadd.f32 %v1830, %v1833
          %v1835 = vrot.slane %v1834, 2
          %v1836 = vadd.f32 %v1834, %v1835
          %v1837 = vrot.slane %v1836, 1
          %v1838 = vadd.f32 %v1836, %v1837
          %v1839 = vmul.f32 %v1838, %v1505
          %v1840 = vmul.f32 %v1830, %v1830
          %v1841 = vrot.slane %v1840, 4
          %v1842 = vadd.f32 %v1840, %v1841
          %v1843 = vrot.slane %v1842, 2
          %v1844 = vadd.f32 %v1842, %v1843
          %v1845 = vrot.slane %v1844, 1
          %v1846 = vadd.f32 %v1844, %v1845
          %v1847 = vmul.f32 %v1846, %v1505
          %v1848 = vmul.f32 %v1839, %v1839
          %v1849 = vsub.f32 %v1847, %v1848
          %v1850 = vsub.f32 %v1830, %v1839
          %v1851 = vadd.f32 %v1849, 1e-05
          %v1852 = vrsqrt.pop %v1851
          %v1853 = vmul.f32 %v1852, %v1851
          %v1854 = vmul.f32 %v1853, %v1852
          %v1855 = vmul.f32 0.5, %v1854
          %v1856 = vsub.f32 1.5, %v1855
          %v1857 = vmul.f32 %v1852, %v1856
          %vm1858 = vweird.f32 %v1851
          %vm1859 = vweird.f32 %v1852
          %vm1860 = vmor %vm1858, %vm1859
          %v1861 = vsel %vm1860, %v1852, %v1857
          %v1862 = vmul.f32 %v1850, %v1861
          %v1863 = vperm.slane %v1755, 0
          %v1864 = vmul.f32 %v1863, %v1862
          %v1865 = vperm.slane %v1758, 0
          %v1866 = vadd.f32 %v1864, %v1865
          %v1867 = vmax.f32 %v1866, 0.0
          %v1868 = vpack.c.bf16 %v1867, %v1867
          %v1869 = vpack.c.bf16 %v1792, %v1791
          %v1870 = vpack.c.bf16 %v1794, %v1793
          %v1871 = vpack.c.bf16 %v1796, %v1795
          %v1872 = vpack.c.bf16 %v1798, %v1797
          %v1873 = vpack.c.bf16 %v1800, %v1799
          %v1874 = vpack.c.bf16 %v1802, %v1801
          %v1875 = vpack.c.bf16 %v1804, %v1803
          %v1876 = vpack.c.bf16 %v1806, %v1805
          %v1877 = vperm.slane %v1809, 0
          %1878 = vmatpush.bf16.msra.mxu0 %v1876
          %1879 = vmatpush.bf16.msra.mxu0 %v1875
          %1880 = vmatpush.bf16.msra.mxu0 %v1874
          %1881 = vmatpush.bf16.msra.mxu0 %v1873
          %1882 = vmatpush.bf16.msra.mxu0 %v1872
          %1883 = vmatpush.bf16.msra.mxu0 %v1871
          %1884 = vmatpush.bf16.msra.mxu0 %v1870
          %1885 = vmatpush.bf16.msra.mxu0 %v1869
          %1886 = vmatmul.bf16.gmra.mxu0 %v1868
          %v1887 = vpop.f32.mrf.mxu0
          %v1888 = vadd.f32 %v1877, %v1887
          %v1889 = vpop.f32.mrf.mxu0
          %1890 = vdwg.mxu0
          %1891 = vst [vmem:[%s250] sm:$0xff] %v1555
          %1892 = vst [vmem:[%s250 + $0x8] sm:$0xff] %v1888
        $region52: #{_byol_forward.1} parent=35 // pred_fallthru
          _
        %s1893 = sand.u32 %s114, 1
        %s1894 = scalar_lea.sflag [#allocation4], %s1893
        %s1895 = sand.u32 %s114, 1
        %s1896 = smul.addr %s1895, 280
        %s1897 = scalar_lea.vmem [#allocation7], %s1896
        %p1898 = scmp.lt.s32.totalorder %s22, 1
        %s1899 = scalar_select %p1898, %s22, 1
        %s1900 = smul.addr %s1899, 2
        %s1901 = smul.addr %s1900, 8
        %s1902 = scalar_lea.vmem %s5, %s1901
        // Predicated region
        $region53: #{_byol_forward.1} parent=35 // pred_check
          %p1903 = pneg %p124
        $region54: #{_byol_forward.1} parent=35 // pred_check_branch
          %1905 = sbr.rel (%p1903) target = $region56
        $region55: #{_byol_forward.1} parent=35 // pred_region
          %s1906 = smul.u32 35, %s22
          %1908 = vsyncadd %s1894, 0
          %s1909 = smul.addr %s1906, 8
          %s1910 = scalar_lea.hbm %s4, %s1909
          %s1911 = sshll.u32 %s1897, 4
          %s1912 = int_to_ptr.vmem [resolvable:$true] %s1911
          %s1913 = sshll.u32 %s1910, 4
          %s1914 = int_to_ptr.hbm [resolvable:$true] %s1913
          %1919 = dma.vmem_to_hbm [thread:$0]  %s1912, 4480, %s1914, %s1894, 128, 128, 8
        $region56: #{_byol_forward.1} parent=35 // pred_fallthru
          _
        // Predicated region
        $region57: #{_byol_forward.1} parent=35 // pred_check
          %p1920 = pneg %p150
        $region58: #{_byol_forward.1} parent=35 // pred_check_branch
          %1922 = sbr.rel (%p1920) target = $region60
        $region59: #{_byol_forward.1} parent=35 // pred_region
          _
        $region60: #{_byol_forward.1} parent=35 // pred_fallthru
          _
      $region36: #{_byol_forward.1} parent=5 // pred_fallthru
        _
      %p1923 = scmp.le.s32.totalorder 2, %s17
      // Predicated region
      $region61: #{_byol_forward.1} parent=5 // pred_check
        %p1924 = pneg %p1923
      $region62: #{_byol_forward.1} parent=5 // pred_check_branch
        %1926 = sbr.rel (%p1924) target = $region64
      $region63: #{_byol_forward.1} parent=5 // pred_region
        %s1927 = ssub.s32 %s17, 2
        // Predicated region
        $region65: #{_byol_forward.1} parent=63 // pred_check
          %p1928 = pneg %p130
        $region66: #{_byol_forward.1} parent=63 // pred_check_branch
          %1930 = sbr.rel (%p1928) target = $region68
        $region67: #{_byol_forward.1} parent=63 // pred_region
          %s1931 = sand.u32 %s115, 1
          %s1932 = scalar_lea.sflag [#allocation4], %s1931
          %s1933 = sand.u32 %s115, 1
          %s1934 = smul.addr %s1933, 280
          %s1935 = scalar_lea.vmem [#allocation7], %s1934
          %1937 = dma.done %s1932, 4480
        $region68: #{_byol_forward.1} parent=63 // pred_fallthru
          _
        // Predicated region
        $region69: #{_byol_forward.1} parent=63 // pred_check
          %p1938 = pneg %p156
        $region70: #{_byol_forward.1} parent=63 // pred_check_branch
          %1940 = sbr.rel (%p1938) target = $region72
        $region71: #{_byol_forward.1} parent=63 // pred_region
          %p1941 = scmp.lt.s32.totalorder %s23, 1
          %s1942 = scalar_select %p1941, %s23, 1
          %s1943 = smul.addr %s1942, 2
          %s1944 = smul.addr %s1943, 8
          %s1945 = scalar_lea.vmem %s5, %s1944
        $region72: #{_byol_forward.1} parent=63 // pred_fallthru
          _
      $region64: #{_byol_forward.1} parent=5 // pred_fallthru
        _
    $region6: #{_byol_forward.1} parent=1 // loop_footer
      %s21 = sadd.s32 1, %s17
    $region7: #{_byol_forward.1} parent=1 // loop_footer_branch
      %16 = sbr.rel target = $region3
    $region8: #{_byol_forward.1} parent=1 // loop_exit
      _
    %1946 = vsyncpa [#allocation3], 1
    %s1947 = scalar_lea.sflag [#allocation3], 1
    %1948 = vsyncpa %s1947, 1
    %1949 = vsyncpa [#allocation6], 1
    %1950 = vsyncpa [#allocation4], 1
    %s1951 = scalar_lea.sflag [#allocation4], 1
    %1952 = vsyncpa %s1951, 1

</llo_original>
